<compile_context>
chip_gen: v7x
topology: tpu7x:2x2x1
jax: 0.10.0
libtpu: 0.0.40
codegen_flags: <defaults>
</compile_context>

<pallas_src>
import functools
import math

import jax
import jax.numpy as jnp
from jax import lax
from jax.experimental import pallas as pl
from jax.experimental.pallas import tpu as pltpu

NEG_INF = -1e30  # large finite negative (avoids inf-inf NaN paths)


# --------------------- Kernel 1: head-major QKV projection ---------------------
def qkv_proj_kernel(x_ref, wq_ref, wk_ref, wv_ref, bq_ref, bk_ref, bv_ref,
                    q_ref, k_ref, v_ref):
    # x_ref: (1, TS, D) f32;  w*_ref: (1, D, hd) bf16;  b*_ref: (1, 1, hd) f32
    # outputs: (1, 1, TS, hd) bf16 slices of the (B, H, S, hd) q/k/v arrays.
    x_bf = x_ref[0].astype(jnp.bfloat16)                       # (TS, D)
    q = jnp.dot(x_bf, wq_ref[0], preferred_element_type=jnp.float32) + bq_ref[0]
    k = jnp.dot(x_bf, wk_ref[0], preferred_element_type=jnp.float32) + bk_ref[0]
    v = jnp.dot(x_bf, wv_ref[0], preferred_element_type=jnp.float32) + bv_ref[0]
    q_ref[0, 0] = q.astype(jnp.bfloat16)
    k_ref[0, 0] = k.astype(jnp.bfloat16)
    v_ref[0, 0] = v.astype(jnp.bfloat16)


# ------------- Kernel 2: flash attention + W_O + residual + MLP + residual -------------
def flash_layer_kernel(q_ref, k_ref, v_ref, x_ref,
                       wo_ref, bo_ref, w1_ref, b1_ref, w2_ref, b2_ref,
                       o_ref,
                       m_ref, l_ref, acc_ref,
                       *, q_tile, kv_tile):
    qi = pl.program_id(1)
    ki = pl.program_id(2)
    nk = pl.num_programs(2)
    q_start = qi * q_tile
    k_start = ki * kv_tile

    @pl.when(ki == 0)
    def _init():
        m_ref[...] = jnp.full_like(m_ref, NEG_INF)
        l_ref[...] = jnp.zeros_like(l_ref)
        acc_ref[...] = jnp.zeros_like(acc_ref)

    # Skip compute for KV blocks entirely above the causal diagonal.
    @pl.when(k_start <= q_start + q_tile - 1)
    def _compute():
        # scores for all heads at once; Q already carries the 1/sqrt(hd) scale.
        s = jnp.einsum('hqd,hkd->hqk', q_ref[0], k_ref[0],
                       preferred_element_type=jnp.float32)      # (H, TQ, TK) f32
        # single 2D causal mask, broadcast over heads
        q_pos = q_start + lax.broadcasted_iota(jnp.int32, (q_tile, kv_tile), 0)
        k_pos = k_start + lax.broadcasted_iota(jnp.int32, (q_tile, kv_tile), 1)
        s = jnp.where((k_pos <= q_pos)[None], s, NEG_INF)

        m_prev = m_ref[...]                                     # (H, TQ, 1)
        m_new = jnp.maximum(m_prev, s.max(axis=-1, keepdims=True))
        alpha = jnp.exp(m_prev - m_new)
        p = jnp.exp(s - m_new)                                  # unnormalized probs
        l_ref[...] = alpha * l_ref[...] + p.sum(axis=-1, keepdims=True)
        acc_ref[...] = alpha * acc_ref[...] + jnp.einsum(
            'hqk,hkd->hqd', p.astype(jnp.bfloat16), v_ref[0],
            preferred_element_type=jnp.float32)                 # (H, TQ, hd)
        m_ref[...] = m_new

    @pl.when(ki == nk - 1)
    def _epilogue():
        # normalize AFTER the PV matmuls: one (H, TQ, hd) multiply, not (H, TQ, TK)
        inv_l = pl.reciprocal(l_ref[...], approx=True)          # (H, TQ, 1)
        ctx = (acc_ref[...] * inv_l).astype(jnp.bfloat16)       # (H, TQ, hd)

        # head merge fused into the output projection (no (TQ, D) merge scratch)
        proj = jnp.einsum('hqd,hdn->hqn', ctx, wo_ref[...],
                          preferred_element_type=jnp.float32)   # (H, TQ, D)
        attn_out = jnp.sum(proj, axis=0) + bo_ref[0]            # (TQ, D) f32
        res1 = attn_out + x_ref[0]                              # residual 1 (f32)

        hidden = jnp.dot(res1.astype(jnp.bfloat16), w1_ref[...],
                         preferred_element_type=jnp.float32) + b1_ref[0]
        hidden = jnp.maximum(hidden, 0.0)
        mlp = jnp.dot(hidden.astype(jnp.bfloat16), w2_ref[...],
                      preferred_element_type=jnp.float32) + b2_ref[0]
        o_ref[0] = (mlp + res1).astype(o_ref.dtype)             # residual 2


def _vmem_limit_bytes():
    """~85% of physical VMEM with 16 MiB headroom; conservative fallback."""
    try:
        cap = pltpu.get_tpu_info().vmem_capacity_bytes
    except Exception:
        return 64 * 1024 * 1024
    return int(min(cap - 16 * 1024 * 1024, cap * 0.85))


def transformer_layer(x, params, n_heads, *, q_tile=None, kv_tile=None,
                      single_buffer_weights=True):
    B, S, D = x.shape
    assert D % n_heads == 0
    hd = D // n_heads
    F = params["w1"].shape[1]
    scale = 1.0 / math.sqrt(hd)
    bf16 = jnp.bfloat16

    TQ = q_tile if q_tile is not None else min(S, 256)
    TK = kv_tile if kv_tile is not None else min(S, 256)
    assert S % TQ == 0 and S % TK == 0, "toy wrapper assumes S divisible by tiles"
    TS = TQ  # row tile for the projection kernel

    vmem_limit = _vmem_limit_bytes()

    # ---- wrapper-side weight permutation: head-major, scale folded into Q ----
    def per_head_w(w, s=1.0):
        return (w * s).reshape(D, n_heads, hd).transpose(1, 0, 2).astype(bf16)  # (H, D, hd)

    def per_head_b(b, s=1.0):
        return (b * s).reshape(1, n_heads, hd).transpose(1, 0, 2)               # (H, 1, hd) f32

    wq_h = per_head_w(params["wq"], scale)
    wk_h = per_head_w(params["wk"])
    wv_h = per_head_w(params["wv"])
    bq_h = per_head_b(params["bq"], scale)
    bk_h = per_head_b(params["bk"])
    bv_h = per_head_b(params["bv"])

    # ---------------- kernel 1: q/k/v in (B, H, S, hd) bf16 ----------------
    q_hm, k_hm, v_hm = pl.pallas_call(
        qkv_proj_kernel,
        out_shape=tuple(jax.ShapeDtypeStruct((B, n_heads, S, hd), bf16)
                        for _ in range(3)),
        grid_spec=pltpu.PrefetchScalarGridSpec(
            num_scalar_prefetch=0,
            grid=(B, S // TS, n_heads),        # head innermost: x tile stays resident
            in_specs=[
                pl.BlockSpec((1, TS, D), lambda b, s, h: (b, s, 0)),
                pl.BlockSpec((1, D, hd), lambda b, s, h: (h, 0, 0)),
                pl.BlockSpec((1, D, hd), lambda b, s, h: (h, 0, 0)),
                pl.BlockSpec((1, D, hd), lambda b, s, h: (h, 0, 0)),
                pl.BlockSpec((1, 1, hd), lambda b, s, h: (h, 0, 0)),
                pl.BlockSpec((1, 1, hd), lambda b, s, h: (h, 0, 0)),
                pl.BlockSpec((1, 1, hd), lambda b, s, h: (h, 0, 0)),
            ],
            out_specs=[
                pl.BlockSpec((1, 1, TS, hd), lambda b, s, h: (b, h, s, 0)),
                pl.BlockSpec((1, 1, TS, hd), lambda b, s, h: (b, h, s, 0)),
                pl.BlockSpec((1, 1, TS, hd), lambda b, s, h: (b, h, s, 0)),
            ],
        ),
        compiler_params=pltpu.CompilerParams(
            dimension_semantics=("parallel", "parallel", "arbitrary"),
            vmem_limit_bytes=vmem_limit,
        ),
    )(x, wq_h, wk_h, wv_h, bq_h, bk_h, bv_h)

    # ---------------- kernel 2: flash attention + W_O + MLP ----------------
    wo_h = params["wo"].reshape(n_heads, hd, D).astype(bf16)    # (H, hd, D)
    w1 = params["w1"].astype(bf16)
    w2 = params["w2"].astype(bf16)

    def const_spec(shape):
        # Grid-invariant weight blocks: fetched once; single-buffer to halve VMEM.
        if single_buffer_weights:
            return pl.BlockSpec(shape, lambda b, qi, ki: tuple(0 for _ in shape),
                                pipeline_mode=pl.Buffered(1))
        return pl.BlockSpec(shape, lambda b, qi, ki: tuple(0 for _ in shape))

    kernel = functools.partial(flash_layer_kernel, q_tile=TQ, kv_tile=TK)
    return pl.pallas_call(
        kernel,
        out_shape=jax.ShapeDtypeStruct((B, S, D), jnp.float32),
        grid_spec=pltpu.PrefetchScalarGridSpec(
            num_scalar_prefetch=0,
            grid=(B, S // TQ, S // TK),
            in_specs=[
                pl.BlockSpec((1, n_heads, TQ, hd), lambda b, qi, ki: (b, 0, qi, 0)),
                pl.BlockSpec((1, n_heads, TK, hd), lambda b, qi, ki: (b, 0, ki, 0)),
                pl.BlockSpec((1, n_heads, TK, hd), lambda b, qi, ki: (b, 0, ki, 0)),
                pl.BlockSpec((1, TQ, D), lambda b, qi, ki: (b, qi, 0)),
                const_spec((n_heads, hd, D)),
                const_spec((1, D)),
                const_spec((D, F)),
                const_spec((1, F)),
                const_spec((F, D)),
                const_spec((1, D)),
            ],
            out_specs=pl.BlockSpec((1, TQ, D), lambda b, qi, ki: (b, qi, 0)),
            scratch_shapes=[
                pltpu.VMEM((n_heads, TQ, 1), jnp.float32),   # running max
                pltpu.VMEM((n_heads, TQ, 1), jnp.float32),   # running denom
                pltpu.VMEM((n_heads, TQ, hd), jnp.float32),  # unnormalized context
            ],
        ),
        compiler_params=pltpu.CompilerParams(
            dimension_semantics=("parallel", "parallel", "arbitrary"),
            vmem_limit_bytes=vmem_limit,
        ),
    )(q_hm, k_hm, v_hm, x, wo_h, params["bo"], w1, params["b1"], w2, params["b2"])


def init_params(key, dim):
    names = ["wq", "wk", "wv", "wo", "w1", "w2"]
    params = {}
    keys = jax.random.split(key, 2 * len(names))
    for i, n in enumerate(names):
        params[n] = (jax.random.normal(keys[2 * i], (dim, dim), jnp.float32)
                     * (1.0 / math.sqrt(dim)))
        params["b" + n[1:]] = (jax.random.normal(keys[2 * i + 1], (1, dim),
                                                 jnp.float32) * 0.01)
    return params


def reference_forward(x, params, n_heads):
    """Pure-JAX f32 reference matching the PyTorch module semantics."""
    B, S, D = x.shape
    hd = D // n_heads

    def lin(inp, w, b):
        return inp @ w + b[0]

    q = lin(x, params["wq"], params["bq"]).reshape(B, S, n_heads, hd).transpose(0, 2, 1, 3)
    k = lin(x, params["wk"], params["bk"]).reshape(B, S, n_heads, hd).transpose(0, 2, 1, 3)
    v = lin(x, params["wv"], params["bv"]).reshape(B, S, n_heads, hd).transpose(0, 2, 1, 3)
    score = jnp.einsum("bhqd,bhkd->bhqk", q, k) / math.sqrt(hd)
    causal = jnp.tril(jnp.ones((S, S), bool))
    score = jnp.where(causal[None, None], score, -jnp.inf)
    attn = jax.nn.softmax(score, axis=-1)
    out = jnp.einsum("bhqk,bhkd->bhqd", attn, v).transpose(0, 2, 1, 3).reshape(B, S, D)
    out = lin(out, params["wo"], params["bo"])
    res1 = out + x
    hidden = jnp.maximum(lin(res1, params["w1"], params["b1"]), 0.0)
    mlp = lin(hidden, params["w2"], params["b2"])
    return mlp + res1


if __name__ == "__main__":
    B, S, D, H = 2, 8, 32, 4
    key = jax.random.PRNGKey(0)
    kx, kp = jax.random.split(key)
    x = jax.random.normal(kx, (B, S, D), jnp.float32)
    params = init_params(kp, D)

    try:
        out = jax.block_until_ready(transformer_layer(x, params, H))
    except Exception:
        # Fallback if this JAX build rejects single-buffered (Buffered(1)) specs.
        out = jax.block_until_ready(
            transformer_layer(x, params, H, single_buffer_weights=False))

    ref = reference_forward(x, params, H)
    assert out.shape == (B, S, D)
    err = float(jnp.max(jnp.abs(out - ref)))
    # bf16 matmul inputs / bf16 q,k,v intermediates + approx reciprocal vs f32 ref.
    assert err < 1e-1, f"max abs err {err}"
    print("KERNEL_OK")
</pallas_src>

<mosaic_0001>
module attributes {stable_mosaic.version = 11 : i64} {
  func.func @qkv_proj_kernel(%arg0: i32, %arg1: i32, %arg2: i32, %arg3: memref<1x8x32xf32, #tpu.memory_space<vmem>>, %arg4: memref<1x32x8xbf16, #tpu.memory_space<vmem>>, %arg5: memref<1x32x8xbf16, #tpu.memory_space<vmem>>, %arg6: memref<1x32x8xbf16, #tpu.memory_space<vmem>>, %arg7: memref<1x1x8xf32, #tpu.memory_space<vmem>>, %arg8: memref<1x1x8xf32, #tpu.memory_space<vmem>>, %arg9: memref<1x1x8xf32, #tpu.memory_space<vmem>>, %arg10: memref<1x1x8x8xbf16, #tpu.memory_space<vmem>>, %arg11: memref<1x1x8x8xbf16, #tpu.memory_space<vmem>>, %arg12: memref<1x1x8x8xbf16, #tpu.memory_space<vmem>>) attributes {dimension_semantics = [#tpu.dimension_semantics<parallel>, #tpu.dimension_semantics<parallel>, #tpu.dimension_semantics<arbitrary>], iteration_bounds = array<i64: 2, 1, 4>, scalar_prefetch = 0 : i64, scratch_operands = 0 : i64, tpu.core_type = #tpu.core_type<tc>, window_params = [{transform_indices = @transform_0, window_bounds = array<i64: 1, 8, 32>}, {transform_indices = @transform_1, window_bounds = array<i64: 1, 32, 8>}, {transform_indices = @transform_2, window_bounds = array<i64: 1, 32, 8>}, {transform_indices = @transform_3, window_bounds = array<i64: 1, 32, 8>}, {transform_indices = @transform_4, window_bounds = array<i64: 1, 1, 8>}, {transform_indices = @transform_5, window_bounds = array<i64: 1, 1, 8>}, {transform_indices = @transform_6, window_bounds = array<i64: 1, 1, 8>}, {transform_indices = @transform_7, window_bounds = array<i64: 1, 1, 8, 8>}, {transform_indices = @transform_8, window_bounds = array<i64: 1, 1, 8, 8>}, {transform_indices = @transform_9, window_bounds = array<i64: 1, 1, 8, 8>}]} {
    %c0 = arith.constant 0 : index
    %c0_0 = arith.constant 0 : index
    %c0_1 = arith.constant 0 : index
    %0 = vector.load %arg3[%c0, %c0_0, %c0_1] : memref<1x8x32xf32, #tpu.memory_space<vmem>>, vector<1x8x32xf32>
    %1 = vector.shape_cast %0 : vector<1x8x32xf32> to vector<8x32xf32>
    %2 = arith.truncf %1 : vector<8x32xf32> to vector<8x32xbf16>
    %c0_2 = arith.constant 0 : index
    %c0_3 = arith.constant 0 : index
    %c0_4 = arith.constant 0 : index
    %3 = vector.load %arg4[%c0_2, %c0_3, %c0_4] : memref<1x32x8xbf16, #tpu.memory_space<vmem>>, vector<1x32x8xbf16>
    %4 = vector.shape_cast %3 : vector<1x32x8xbf16> to vector<32x8xbf16>
    %cst = arith.constant dense<0.000000e+00> : vector<8x8xf32>
    %5 = tpu.matmul %2, %4, %cst {dimension_numbers = #tpu.dot_dimension_numbers<[1], [0], [0], [1], [0, 0, 1, 1], [], []>} : vector<8x32xbf16>, vector<32x8xbf16>, vector<8x8xf32> -> vector<8x8xf32>
    %c0_5 = arith.constant 0 : index
    %c0_6 = arith.constant 0 : index
    %c0_7 = arith.constant 0 : index
    %6 = vector.load %arg7[%c0_5, %c0_6, %c0_7] : memref<1x1x8xf32, #tpu.memory_space<vmem>>, vector<1x1x8xf32>
    %7 = vector.shape_cast %6 : vector<1x1x8xf32> to vector<1x8xf32>
    %8 = vector.broadcast %7 : vector<1x8xf32> to vector<8x8xf32>
    %9 = arith.addf %5, %8 : vector<8x8xf32>
    %c0_8 = arith.constant 0 : index
    %c0_9 = arith.constant 0 : index
    %c0_10 = arith.constant 0 : index
    %10 = vector.load %arg5[%c0_8, %c0_9, %c0_10] : memref<1x32x8xbf16, #tpu.memory_space<vmem>>, vector<1x32x8xbf16>
    %11 = vector.shape_cast %10 : vector<1x32x8xbf16> to vector<32x8xbf16>
    %cst_11 = arith.constant dense<0.000000e+00> : vector<8x8xf32>
    %12 = tpu.matmul %2, %11, %cst_11 {dimension_numbers = #tpu.dot_dimension_numbers<[1], [0], [0], [1], [0, 0, 1, 1], [], []>} : vector<8x32xbf16>, vector<32x8xbf16>, vector<8x8xf32> -> vector<8x8xf32>
    %c0_12 = arith.constant 0 : index
    %c0_13 = arith.constant 0 : index
    %c0_14 = arith.constant 0 : index
    %13 = vector.load %arg8[%c0_12, %c0_13, %c0_14] : memref<1x1x8xf32, #tpu.memory_space<vmem>>, vector<1x1x8xf32>
    %14 = vector.shape_cast %13 : vector<1x1x8xf32> to vector<1x8xf32>
    %15 = vector.broadcast %14 : vector<1x8xf32> to vector<8x8xf32>
    %16 = arith.addf %12, %15 : vector<8x8xf32>
    %c0_15 = arith.constant 0 : index
    %c0_16 = arith.constant 0 : index
    %c0_17 = arith.constant 0 : index
    %17 = vector.load %arg6[%c0_15, %c0_16, %c0_17] : memref<1x32x8xbf16, #tpu.memory_space<vmem>>, vector<1x32x8xbf16>
    %18 = vector.shape_cast %17 : vector<1x32x8xbf16> to vector<32x8xbf16>
    %cst_18 = arith.constant dense<0.000000e+00> : vector<8x8xf32>
    %19 = tpu.matmul %2, %18, %cst_18 {dimension_numbers = #tpu.dot_dimension_numbers<[1], [0], [0], [1], [0, 0, 1, 1], [], []>} : vector<8x32xbf16>, vector<32x8xbf16>, vector<8x8xf32> -> vector<8x8xf32>
    %c0_19 = arith.constant 0 : index
    %c0_20 = arith.constant 0 : index
    %c0_21 = arith.constant 0 : index
    %20 = vector.load %arg9[%c0_19, %c0_20, %c0_21] : memref<1x1x8xf32, #tpu.memory_space<vmem>>, vector<1x1x8xf32>
    %21 = vector.shape_cast %20 : vector<1x1x8xf32> to vector<1x8xf32>
    %22 = vector.broadcast %21 : vector<1x8xf32> to vector<8x8xf32>
    %23 = arith.addf %19, %22 : vector<8x8xf32>
    %24 = arith.truncf %9 : vector<8x8xf32> to vector<8x8xbf16>
    %c0_22 = arith.constant 0 : index
    %c0_23 = arith.constant 0 : index
    %c0_24 = arith.constant 0 : index
    %c0_25 = arith.constant 0 : index
    %25 = vector.load %arg10[%c0_22, %c0_23, %c0_24, %c0_25] : memref<1x1x8x8xbf16, #tpu.memory_space<vmem>>, vector<1x1x8x8xbf16>
    %26 = vector.shape_cast %25 : vector<1x1x8x8xbf16> to vector<8x8xbf16>
    %27 = vector.shape_cast %24 : vector<8x8xbf16> to vector<1x1x8x8xbf16>
    tpu.vector_store %arg10[%c0_22, %c0_23, %c0_24, %c0_25], %27 {strides = array<i32>} : memref<1x1x8x8xbf16, #tpu.memory_space<vmem>>, vector<1x1x8x8xbf16>,
    %28 = arith.truncf %16 : vector<8x8xf32> to vector<8x8xbf16>
    %c0_26 = arith.constant 0 : index
    %c0_27 = arith.constant 0 : index
    %c0_28 = arith.constant 0 : index
    %c0_29 = arith.constant 0 : index
    %29 = vector.load %arg11[%c0_26, %c0_27, %c0_28, %c0_29] : memref<1x1x8x8xbf16, #tpu.memory_space<vmem>>, vector<1x1x8x8xbf16>
    %30 = vector.shape_cast %29 : vector<1x1x8x8xbf16> to vector<8x8xbf16>
    %31 = vector.shape_cast %28 : vector<8x8xbf16> to vector<1x1x8x8xbf16>
    tpu.vector_store %arg11[%c0_26, %c0_27, %c0_28, %c0_29], %31 {strides = array<i32>} : memref<1x1x8x8xbf16, #tpu.memory_space<vmem>>, vector<1x1x8x8xbf16>,
    %32 = arith.truncf %23 : vector<8x8xf32> to vector<8x8xbf16>
    %c0_30 = arith.constant 0 : index
    %c0_31 = arith.constant 0 : index
    %c0_32 = arith.constant 0 : index
    %c0_33 = arith.constant 0 : index
    %33 = vector.load %arg12[%c0_30, %c0_31, %c0_32, %c0_33] : memref<1x1x8x8xbf16, #tpu.memory_space<vmem>>, vector<1x1x8x8xbf16>
    %34 = vector.shape_cast %33 : vector<1x1x8x8xbf16> to vector<8x8xbf16>
    %35 = vector.shape_cast %32 : vector<8x8xbf16> to vector<1x1x8x8xbf16>
    tpu.vector_store %arg12[%c0_30, %c0_31, %c0_32, %c0_33], %35 {strides = array<i32>} : memref<1x1x8x8xbf16, #tpu.memory_space<vmem>>, vector<1x1x8x8xbf16>,
    return
  }
  func.func @transform_0(%arg0: i32, %arg1: i32, %arg2: i32) -> (i32, i32, i32) {
    %c0_i32 = arith.constant 0 : i32
    %c0_i32_0 = arith.constant 0 : i32
    return %arg0, %arg1, %c0_i32 : i32, i32, i32
  }
  func.func @transform_1(%arg0: i32, %arg1: i32, %arg2: i32) -> (i32, i32, i32) {
    %c0_i32 = arith.constant 0 : i32
    %c0_i32_0 = arith.constant 0 : i32
    %c0_i32_1 = arith.constant 0 : i32
    return %arg2, %c0_i32, %c0_i32_0 : i32, i32, i32
  }
  func.func @transform_2(%arg0: i32, %arg1: i32, %arg2: i32) -> (i32, i32, i32) {
    %c0_i32 = arith.constant 0 : i32
    %c0_i32_0 = arith.constant 0 : i32
    %c0_i32_1 = arith.constant 0 : i32
    return %arg2, %c0_i32, %c0_i32_0 : i32, i32, i32
  }
  func.func @transform_3(%arg0: i32, %arg1: i32, %arg2: i32) -> (i32, i32, i32) {
    %c0_i32 = arith.constant 0 : i32
    %c0_i32_0 = arith.constant 0 : i32
    %c0_i32_1 = arith.constant 0 : i32
    return %arg2, %c0_i32, %c0_i32_0 : i32, i32, i32
  }
  func.func @transform_4(%arg0: i32, %arg1: i32, %arg2: i32) -> (i32, i32, i32) {
    %c0_i32 = arith.constant 0 : i32
    %c0_i32_0 = arith.constant 0 : i32
    %c0_i32_1 = arith.constant 0 : i32
    return %arg2, %c0_i32, %c0_i32_0 : i32, i32, i32
  }
  func.func @transform_5(%arg0: i32, %arg1: i32, %arg2: i32) -> (i32, i32, i32) {
    %c0_i32 = arith.constant 0 : i32
    %c0_i32_0 = arith.constant 0 : i32
    %c0_i32_1 = arith.constant 0 : i32
    return %arg2, %c0_i32, %c0_i32_0 : i32, i32, i32
  }
  func.func @transform_6(%arg0: i32, %arg1: i32, %arg2: i32) -> (i32, i32, i32) {
    %c0_i32 = arith.constant 0 : i32
    %c0_i32_0 = arith.constant 0 : i32
    %c0_i32_1 = arith.constant 0 : i32
    return %arg2, %c0_i32, %c0_i32_0 : i32, i32, i32
  }
  func.func @transform_7(%arg0: i32, %arg1: i32, %arg2: i32) -> (i32, i32, i32, i32) {
    %c0_i32 = arith.constant 0 : i32
    %c0_i32_0 = arith.constant 0 : i32
    return %arg0, %arg2, %arg1, %c0_i32 : i32, i32, i32, i32
  }
  func.func @transform_8(%arg0: i32, %arg1: i32, %arg2: i32) -> (i32, i32, i32, i32) {
    %c0_i32 = arith.constant 0 : i32
    %c0_i32_0 = arith.constant 0 : i32
    return %arg0, %arg2, %arg1, %c0_i32 : i32, i32, i32, i32
  }
  func.func @transform_9(%arg0: i32, %arg1: i32, %arg2: i32) -> (i32, i32, i32, i32) {
    %c0_i32 = arith.constant 0 : i32
    %c0_i32_0 = arith.constant 0 : i32
    return %arg0, %arg2, %arg1, %c0_i32 : i32, i32, i32, i32
  }
}

module attributes {stable_mosaic.version = 11 : i64} {
  func.func @qkv_proj_kernel(%arg0: i32, %arg1: i32, %arg2: i32, %arg3: memref<1x8x32xf32, #tpu.memory_space<vmem>>, %arg4: memref<1x32x8xbf16, #tpu.memory_space<vmem>>, %arg5: memref<1x32x8xbf16, #tpu.memory_space<vmem>>, %arg6: memref<1x32x8xbf16, #tpu.memory_space<vmem>>, %arg7: memref<1x1x8xf32, #tpu.memory_space<vmem>>, %arg8: memref<1x1x8xf32, #tpu.memory_space<vmem>>, %arg9: memref<1x1x8xf32, #tpu.memory_space<vmem>>, %arg10: memref<1x1x8x8xbf16, #tpu.memory_space<vmem>>, %arg11: memref<1x1x8x8xbf16, #tpu.memory_space<vmem>>, %arg12: memref<1x1x8x8xbf16, #tpu.memory_space<vmem>>) attributes {dimension_semantics = [#tpu.dimension_semantics<parallel>, #tpu.dimension_semantics<parallel>, #tpu.dimension_semantics<arbitrary>], iteration_bounds = array<i64: 2, 1, 4>, scalar_prefetch = 0 : i64, scratch_operands = 0 : i64, tpu.core_type = #tpu.core_type<tc>, window_params = [{transform_indices = @transform_0, window_bounds = array<i64: 1, 8, 32>}, {transform_indices = @transform_1, window_bounds = array<i64: 1, 32, 8>}, {transform_indices = @transform_2, window_bounds = array<i64: 1, 32, 8>}, {transform_indices = @transform_3, window_bounds = array<i64: 1, 32, 8>}, {transform_indices = @transform_4, window_bounds = array<i64: 1, 1, 8>}, {transform_indices = @transform_5, window_bounds = array<i64: 1, 1, 8>}, {transform_indices = @transform_6, window_bounds = array<i64: 1, 1, 8>}, {transform_indices = @transform_7, window_bounds = array<i64: 1, 1, 8, 8>}, {transform_indices = @transform_8, window_bounds = array<i64: 1, 1, 8, 8>}, {transform_indices = @transform_9, window_bounds = array<i64: 1, 1, 8, 8>}]} {
    %c0 = arith.constant 0 : index
    %c0_0 = arith.constant 0 : index
    %c0_1 = arith.constant 0 : index
    %0 = vector.load %arg3[%c0, %c0_0, %c0_1] : memref<1x8x32xf32, #tpu.memory_space<vmem>>, vector<1x8x32xf32>
    %1 = vector.shape_cast %0 : vector<1x8x32xf32> to vector<8x32xf32>
    %2 = arith.truncf %1 : vector<8x32xf32> to vector<8x32xbf16>
    %c0_2 = arith.constant 0 : index
    %c0_3 = arith.constant 0 : index
    %c0_4 = arith.constant 0 : index
    %3 = vector.load %arg4[%c0_2, %c0_3, %c0_4] : memref<1x32x8xbf16, #tpu.memory_space<vmem>>, vector<1x32x8xbf16>
    %4 = vector.shape_cast %3 : vector<1x32x8xbf16> to vector<32x8xbf16>
    %cst = arith.constant dense<0.000000e+00> : vector<8x8xf32>
    %5 = tpu.matmul %2, %4, %cst {dimension_numbers = #tpu.dot_dimension_numbers<[1], [0], [0], [1], [0, 0, 1, 1], [], []>} : vector<8x32xbf16>, vector<32x8xbf16>, vector<8x8xf32> -> vector<8x8xf32>
    %c0_5 = arith.constant 0 : index
    %c0_6 = arith.constant 0 : index
    %c0_7 = arith.constant 0 : index
    %6 = vector.load %arg7[%c0_5, %c0_6, %c0_7] : memref<1x1x8xf32, #tpu.memory_space<vmem>>, vector<1x1x8xf32>
    %7 = vector.shape_cast %6 : vector<1x1x8xf32> to vector<1x8xf32>
    %8 = vector.broadcast %7 : vector<1x8xf32> to vector<8x8xf32>
    %9 = arith.addf %5, %8 : vector<8x8xf32>
    %c0_8 = arith.constant 0 : index
    %c0_9 = arith.constant 0 : index
    %c0_10 = arith.constant 0 : index
    %10 = vector.load %arg5[%c0_8, %c0_9, %c0_10] : memref<1x32x8xbf16, #tpu.memory_space<vmem>>, vector<1x32x8xbf16>
    %11 = vector.shape_cast %10 : vector<1x32x8xbf16> to vector<32x8xbf16>
    %cst_11 = arith.constant dense<0.000000e+00> : vector<8x8xf32>
    %12 = tpu.matmul %2, %11, %cst_11 {dimension_numbers = #tpu.dot_dimension_numbers<[1], [0], [0], [1], [0, 0, 1, 1], [], []>} : vector<8x32xbf16>, vector<32x8xbf16>, vector<8x8xf32> -> vector<8x8xf32>
    %c0_12 = arith.constant 0 : index
    %c0_13 = arith.constant 0 : index
    %c0_14 = arith.constant 0 : index
    %13 = vector.load %arg8[%c0_12, %c0_13, %c0_14] : memref<1x1x8xf32, #tpu.memory_space<vmem>>, vector<1x1x8xf32>
    %14 = vector.shape_cast %13 : vector<1x1x8xf32> to vector<1x8xf32>
    %15 = vector.broadcast %14 : vector<1x8xf32> to vector<8x8xf32>
    %16 = arith.addf %12, %15 : vector<8x8xf32>
    %c0_15 = arith.constant 0 : index
    %c0_16 = arith.constant 0 : index
    %c0_17 = arith.constant 0 : index
    %17 = vector.load %arg6[%c0_15, %c0_16, %c0_17] : memref<1x32x8xbf16, #tpu.memory_space<vmem>>, vector<1x32x8xbf16>
    %18 = vector.shape_cast %17 : vector<1x32x8xbf16> to vector<32x8xbf16>
    %cst_18 = arith.constant dense<0.000000e+00> : vector<8x8xf32>
    %19 = tpu.matmul %2, %18, %cst_18 {dimension_numbers = #tpu.dot_dimension_numbers<[1], [0], [0], [1], [0, 0, 1, 1], [], []>} : vector<8x32xbf16>, vector<32x8xbf16>, vector<8x8xf32> -> vector<8x8xf32>
    %c0_19 = arith.constant 0 : index
    %c0_20 = arith.constant 0 : index
    %c0_21 = arith.constant 0 : index
    %20 = vector.load %arg9[%c0_19, %c0_20, %c0_21] : memref<1x1x8xf32, #tpu.memory_space<vmem>>, vector<1x1x8xf32>
    %21 = vector.shape_cast %20 : vector<1x1x8xf32> to vector<1x8xf32>
    %22 = vector.broadcast %21 : vector<1x8xf32> to vector<8x8xf32>
    %23 = arith.addf %19, %22 : vector<8x8xf32>
    %24 = arith.truncf %9 : vector<8x8xf32> to vector<8x8xbf16>
    %c0_22 = arith.constant 0 : index
    %c0_23 = arith.constant 0 : index
    %c0_24 = arith.constant 0 : index
    %c0_25 = arith.constant 0 : index
    %25 = vector.load %arg10[%c0_22, %c0_23, %c0_24, %c0_25] : memref<1x1x8x8xbf16, #tpu.memory_space<vmem>>, vector<1x1x8x8xbf16>
    %26 = vector.shape_cast %25 : vector<1x1x8x8xbf16> to vector<8x8xbf16>
    %27 = vector.shape_cast %24 : vector<8x8xbf16> to vector<1x1x8x8xbf16>
    tpu.vector_store %arg10[%c0_22, %c0_23, %c0_24, %c0_25], %27 {strides = array<i32>} : memref<1x1x8x8xbf16, #tpu.memory_space<vmem>>, vector<1x1x8x8xbf16>,
    %28 = arith.truncf %16 : vector<8x8xf32> to vector<8x8xbf16>
    %c0_26 = arith.constant 0 : index
    %c0_27 = arith.constant 0 : index
    %c0_28 = arith.constant 0 : index
    %c0_29 = arith.constant 0 : index
    %29 = vector.load %arg11[%c0_26, %c0_27, %c0_28, %c0_29] : memref<1x1x8x8xbf16, #tpu.memory_space<vmem>>, vector<1x1x8x8xbf16>
    %30 = vector.shape_cast %29 : vector<1x1x8x8xbf16> to vector<8x8xbf16>
    %31 = vector.shape_cast %28 : vector<8x8xbf16> to vector<1x1x8x8xbf16>
    tpu.vector_store %arg11[%c0_26, %c0_27, %c0_28, %c0_29], %31 {strides = array<i32>} : memref<1x1x8x8xbf16, #tpu.memory_space<vmem>>, vector<1x1x8x8xbf16>,
    %32 = arith.truncf %23 : vector<8x8xf32> to vector<8x8xbf16>
    %c0_30 = arith.constant 0 : index
    %c0_31 = arith.constant 0 : index
    %c0_32 = arith.constant 0 : index
    %c0_33 = arith.constant 0 : index
    %33 = vector.load %arg12[%c0_30, %c0_31, %c0_32, %c0_33] : memref<1x1x8x8xbf16, #tpu.memory_space<vmem>>, vector<1x1x8x8xbf16>
    %34 = vector.shape_cast %33 : vector<1x1x8x8xbf16> to vector<8x8xbf16>
    %35 = vector.shape_cast %32 : vector<8x8xbf16> to vector<1x1x8x8xbf16>
    tpu.vector_store %arg12[%c0_30, %c0_31, %c0_32, %c0_33], %35 {strides = array<i32>} : memref<1x1x8x8xbf16, #tpu.memory_space<vmem>>, vector<1x1x8x8xbf16>,
    return
  }
  func.func @transform_0(%arg0: i32, %arg1: i32, %arg2: i32) -> (i32, i32, i32) {
    %c0_i32 = arith.constant 0 : i32
    %c0_i32_0 = arith.constant 0 : i32
    return %arg0, %arg1, %c0_i32 : i32, i32, i32
  }
  func.func @transform_1(%arg0: i32, %arg1: i32, %arg2: i32) -> (i32, i32, i32) {
    %c0_i32 = arith.constant 0 : i32
    %c0_i32_0 = arith.constant 0 : i32
    %c0_i32_1 = arith.constant 0 : i32
    return %arg2, %c0_i32, %c0_i32_0 : i32, i32, i32
  }
  func.func @transform_2(%arg0: i32, %arg1: i32, %arg2: i32) -> (i32, i32, i32) {
    %c0_i32 = arith.constant 0 : i32
    %c0_i32_0 = arith.constant 0 : i32
    %c0_i32_1 = arith.constant 0 : i32
    return %arg2, %c0_i32, %c0_i32_0 : i32, i32, i32
  }
  func.func @transform_3(%arg0: i32, %arg1: i32, %arg2: i32) -> (i32, i32, i32) {
    %c0_i32 = arith.constant 0 : i32
    %c0_i32_0 = arith.constant 0 : i32
    %c0_i32_1 = arith.constant 0 : i32
    return %arg2, %c0_i32, %c0_i32_0 : i32, i32, i32
  }
  func.func @transform_4(%arg0: i32, %arg1: i32, %arg2: i32) -> (i32, i32, i32) {
    %c0_i32 = arith.constant 0 : i32
    %c0_i32_0 = arith.constant 0 : i32
    %c0_i32_1 = arith.constant 0 : i32
    return %arg2, %c0_i32, %c0_i32_0 : i32, i32, i32
  }
  func.func @transform_5(%arg0: i32, %arg1: i32, %arg2: i32) -> (i32, i32, i32) {
    %c0_i32 = arith.constant 0 : i32
    %c0_i32_0 = arith.constant 0 : i32
    %c0_i32_1 = arith.constant 0 : i32
    return %arg2, %c0_i32, %c0_i32_0 : i32, i32, i32
  }
  func.func @transform_6(%arg0: i32, %arg1: i32, %arg2: i32) -> (i32, i32, i32) {
    %c0_i32 = arith.constant 0 : i32
    %c0_i32_0 = arith.constant 0 : i32
    %c0_i32_1 = arith.constant 0 : i32
    return %arg2, %c0_i32, %c0_i32_0 : i32, i32, i32
  }
  func.func @transform_7(%arg0: i32, %arg1: i32, %arg2: i32) -> (i32, i32, i32, i32) {
    %c0_i32 = arith.constant 0 : i32
    %c0_i32_0 = arith.constant 0 : i32
    return %arg0, %arg2, %arg1, %c0_i32 : i32, i32, i32, i32
  }
  func.func @transform_8(%arg0: i32, %arg1: i32, %arg2: i32) -> (i32, i32, i32, i32) {
    %c0_i32 = arith.constant 0 : i32
    %c0_i32_0 = arith.constant 0 : i32
    return %arg0, %arg2, %arg1, %c0_i32 : i32, i32, i32, i32
  }
  func.func @transform_9(%arg0: i32, %arg1: i32, %arg2: i32) -> (i32, i32, i32, i32) {
    %c0_i32 = arith.constant 0 : i32
    %c0_i32_0 = arith.constant 0 : i32
    return %arg0, %arg2, %arg1, %c0_i32 : i32, i32, i32, i32
  }
}

</mosaic_0001>

<llo_original>
// kernel: tpu_custom_call.1
$region0: #{tpu_custom_call.1}
  #allocation0 [shape = 'u32[]', space=smem, size = 0x4, offset = 0x4, fixed_abs, tag = 'smem constant byte address 0x4 - core index']
  #allocation1 [shape = 'u32[144,128]{1,0:T(1,128)}', space=vmem, size = 0x12000, scoped, tag = 'internal scratch']
  %s0 = inlined_call_operand.hbm [shape: f32[2,8,32], index: 0, kind: input, shape index: {}]
  %s1 = inlined_call_operand.hbm [shape: bf16[4,32,8], index: 1, kind: input, shape index: {}]
  %s2 = inlined_call_operand.hbm [shape: bf16[4,32,8], index: 2, kind: input, shape index: {}]
  %s3 = inlined_call_operand.hbm [shape: bf16[4,32,8], index: 3, kind: input, shape index: {}]
  %s4 = inlined_call_operand.hbm [shape: f32[4,1,8], index: 4, kind: input, shape index: {}]
  %s5 = inlined_call_operand.hbm [shape: f32[4,1,8], index: 5, kind: input, shape index: {}]
  %s6 = inlined_call_operand.hbm [shape: f32[4,1,8], index: 6, kind: input, shape index: {}]
  %s7 = inlined_call_operand.hbm [shape: bf16[2,4,8,8], index: 7, kind: output, shape index: {0}]
  %s8 = inlined_call_operand.hbm [shape: bf16[2,4,8,8], index: 8, kind: output, shape index: {1}]
  %s9 = inlined_call_operand.hbm [shape: bf16[2,4,8,8], index: 9, kind: output, shape index: {2}]
  %10 = xla_tuple %s7, %s8, %s9
  %s11 = sld [smem:[#allocation0]]
  $region105: #{tpu_custom_call.1} parent=0
    _
  %s13 = ssub.s32 1, %s11
  %s14 = scalar_select 0, %s13, %s11
  $region1: #{tpu_custom_call.1} parent=0
    #allocation2 [shape = 'u8[8192]{0}', space=vmem, size = 0x2000, scoped, tag = 'input window, operand 0']
    #allocation3 [shape = 's32[2]{0}', space=sflag, size = 0x8, scoped, tag = 'scoped memory for tpu_custom_call.1']
    #allocation4 [shape = 's32[2]{0}', space=sflag, size = 0x8, scoped, tag = 'scoped memory for tpu_custom_call.1']
    #allocation5 [shape = 'u8[16384]{0}', space=vmem, size = 0x4000, scoped, tag = 'input window, operand 1']
    #allocation6 [shape = 's32[2]{0}', space=sflag, size = 0x8, scoped, tag = 'scoped memory for tpu_custom_call.1']
    #allocation7 [shape = 'u8[16384]{0}', space=vmem, size = 0x4000, scoped, tag = 'input window, operand 2']
    #allocation8 [shape = 'u8[16384]{0}', space=vmem, size = 0x4000, scoped, tag = 'input window, operand 3']
    #allocation9 [shape = 's32[2]{0}', space=sflag, size = 0x8, scoped, tag = 'scoped memory for tpu_custom_call.1']
    #allocation10 [shape = 'u8[1024]{0}', space=vmem, size = 0x400, scoped, tag = 'input window, operand 4']
    #allocation11 [shape = 'u8[1024]{0}', space=vmem, size = 0x400, scoped, tag = 'input window, operand 5']
    #allocation12 [shape = 's32[2]{0}', space=sflag, size = 0x8, scoped, tag = 'scoped memory for tpu_custom_call.1']
    #allocation13 [shape = 'u8[1024]{0}', space=vmem, size = 0x400, scoped, tag = 'input window, operand 6']
    #allocation14 [shape = 'u8[4096]{0}', space=vmem, size = 0x1000, scoped, tag = 'output window, operand 0']
    #allocation15 [shape = 'u8[4096]{0}', space=vmem, size = 0x1000, scoped, tag = 'output window, operand 1']
    #allocation16 [shape = 's32[2]{0}', space=sflag, size = 0x8, scoped, tag = 'scoped memory for tpu_custom_call.1']
    #allocation17 [shape = 'u8[4096]{0}', space=vmem, size = 0x1000, scoped, tag = 'output window, operand 2']
    %15 = vsyncpa [#allocation3], 0
    %s16 = scalar_lea.sflag [#allocation3], 1
    %17 = vsyncpa %s16, 0
    %18 = vsyncpa [#allocation6], 0
    %s19 = scalar_lea.sflag [#allocation6], 1
    %20 = vsyncpa %s19, 0
    %21 = vsyncpa [#allocation9], 0
    %s22 = scalar_lea.sflag [#allocation9], 1
    %23 = vsyncpa %s22, 0
    %24 = vsyncpa [#allocation12], 0
    %s25 = scalar_lea.sflag [#allocation12], 1
    %26 = vsyncpa %s25, 0
    %27 = vsyncpa [#allocation4], 0
    %s28 = scalar_lea.sflag [#allocation4], 1
    %29 = vsyncpa %s28, 0
    %30 = vsyncpa [#allocation16], 0
    %s31 = scalar_lea.sflag [#allocation16], 1
    %32 = vsyncpa %s31, 0
    loop: start=0, step=1, limit=10
    $region2: #{tpu_custom_call.1} parent=1 // loop_pre_header
      _
    $region3: #{tpu_custom_call.1} parent=1 // loop_header
      %s34 = sphi 0, %s38
      %p35 = scmp.ge.s32.totalorder %s34, 10
      %s41 = sphi 0, %s60
      %s42 = sphi 0, %s56
      %s43 = sphi 0, %s52
      %s44 = sphi 0, %s41
      %s45 = sphi 0, %s42
      %s46 = sphi 0, %s43
      %s47 = sphi 0, %s44
      %s48 = sphi 0, %s45
      %s49 = sphi 0, %s46
      %s65 = sphi 0, %s67
      %s68 = sphi 0, %s65
      %s69 = sphi 0, %s68
      %s85 = sphi 0, %s69
      %s91 = sphi 0, %s93
      %s94 = sphi 0, %s91
      %s95 = sphi 0, %s94
      %s111 = sphi 0, %s95
      %s117 = sphi 0, %s119
      %s120 = sphi 0, %s117
      %s121 = sphi 0, %s120
      %s137 = sphi 0, %s121
      %s143 = sphi 0, %s145
      %s146 = sphi 0, %s143
      %s147 = sphi 0, %s146
      %s163 = sphi 0, %s147
      %s169 = sphi 0, %s171
      %s172 = sphi 0, %s169
      %s173 = sphi 0, %s172
      %s189 = sphi 0, %s173
      %s195 = sphi 0, %s197
      %s198 = sphi 0, %s195
      %s199 = sphi 0, %s198
      %s215 = sphi 0, %s199
      %s221 = sphi 0, %s223
      %s224 = sphi 0, %s221
      %s225 = sphi 0, %s224
      %s241 = sphi 0, %s225
      %s251 = sphi 0, %s253
      %s254 = sphi 0, %s251
      %s255 = sphi 0, %s254
      %s271 = sphi 0, %s255
      %s281 = sphi 0, %s283
      %s284 = sphi 0, %s281
      %s285 = sphi 0, %s284
      %s301 = sphi 0, %s285
      %s311 = sphi 0, %s313
      %s314 = sphi 0, %s311
      %s315 = sphi 0, %s314
      %s331 = sphi 0, %s315
    $region4: #{tpu_custom_call.1} parent=1 // loop_header_branch
      %37 = sbr.rel (%p35) target = $region8
    $region5: #{tpu_custom_call.1} parent=1 // loop_body
      %s39 = ssub.s32 %s34, 1
      %s40 = ssub.s32 %s34, 2
      %s50 = sadd.s32 1, %s43
      %p51 = scmp.ge.s32.totalorder %s50, 4
      %s52 = scalar_select %p51, 0, %s50
      %s53 = sadd.s32 1, %s42
      %s54 = scalar_select %p51, %s53, %s42
      %p55 = scmp.ge.s32.totalorder %s54, 1
      %s56 = scalar_select %p55, 0, %s54
      %s57 = sadd.s32 1, %s41
      %s58 = scalar_select %p55, %s57, %s41
      %p59 = scmp.ge.s32.totalorder %s58, 2
      %s60 = scalar_select %p59, 0, %s58
      %s61 = ssub.s32 %s41, %s60
      %s62 = ssub.s32 %s42, %s56
      %s63 = sor.u32 %s61, %s62
      %p64 = scmp.eq.s32.totalorder %s63, 0
      %s66 = sadd.s32 %s65, 1
      %s67 = scalar_select %p64, %s65, %s66
      %p70 = pneg %p64
      %p71 = scmp.eq.s32.totalorder %s34, 7
      %p72 = por %p70, %p71
      %p73 = scmp.ne.s32.totalorder %s65, %s68
      %p74 = scmp.eq.s32.totalorder %s34, 0
      %p75 = por %p73, %p74
      %p76 = scmp.ne.s32.totalorder %s65, %s68
      %p77 = scmp.eq.s32.totalorder %s39, 7
      %p78 = por %p76, %p77
      %p79 = scmp.ne.s32.totalorder %s68, %s69
      %p80 = scmp.eq.s32.totalorder %s39, 0
      %p81 = por %p79, %p80
      %p82 = scmp.ne.s32.totalorder %s68, %s69
      %p83 = scmp.eq.s32.totalorder %s40, 7
      %p84 = por %p82, %p83
      %p86 = scmp.ne.s32.totalorder %s69, %s85
      %p87 = scmp.eq.s32.totalorder %s40, 0
      %p88 = por %p86, %p87
      %s89 = ssub.s32 %s43, %s52
      %p90 = scmp.eq.s32.totalorder %s89, 0
      %s92 = sadd.s32 %s91, 1
      %s93 = scalar_select %p90, %s91, %s92
      %p96 = pneg %p90
      %p97 = scmp.eq.s32.totalorder %s34, 7
      %p98 = por %p96, %p97
      %p99 = scmp.ne.s32.totalorder %s91, %s94
      %p100 = scmp.eq.s32.totalorder %s34, 0
      %p101 = por %p99, %p100
      %p102 = scmp.ne.s32.totalorder %s91, %s94
      %p103 = scmp.eq.s32.totalorder %s39, 7
      %p104 = por %p102, %p103
      %p105 = scmp.ne.s32.totalorder %s94, %s95
      %p106 = scmp.eq.s32.totalorder %s39, 0
      %p107 = por %p105, %p106
      %p108 = scmp.ne.s32.totalorder %s94, %s95
      %p109 = scmp.eq.s32.totalorder %s40, 7
      %p110 = por %p108, %p109
      %p112 = scmp.ne.s32.totalorder %s95, %s111
      %p113 = scmp.eq.s32.totalorder %s40, 0
      %p114 = por %p112, %p113
      %s115 = ssub.s32 %s43, %s52
      %p116 = scmp.eq.s32.totalorder %s115, 0
      %s118 = sadd.s32 %s117, 1
      %s119 = scalar_select %p116, %s117, %s118
      %p122 = pneg %p116
      %p123 = scmp.eq.s32.totalorder %s34, 7
      %p124 = por %p122, %p123
      %p125 = scmp.ne.s32.totalorder %s117, %s120
      %p126 = scmp.eq.s32.totalorder %s34, 0
      %p127 = por %p125, %p126
      %p128 = scmp.ne.s32.totalorder %s117, %s120
      %p129 = scmp.eq.s32.totalorder %s39, 7
      %p130 = por %p128, %p129
      %p131 = scmp.ne.s32.totalorder %s120, %s121
      %p132 = scmp.eq.s32.totalorder %s39, 0
      %p133 = por %p131, %p132
      %p134 = scmp.ne.s32.totalorder %s120, %s121
      %p135 = scmp.eq.s32.totalorder %s40, 7
      %p136 = por %p134, %p135
      %p138 = scmp.ne.s32.totalorder %s121, %s137
      %p139 = scmp.eq.s32.totalorder %s40, 0
      %p140 = por %p138, %p139
      %s141 = ssub.s32 %s43, %s52
      %p142 = scmp.eq.s32.totalorder %s141, 0
      %s144 = sadd.s32 %s143, 1
      %s145 = scalar_select %p142, %s143, %s144
      %p148 = pneg %p142
      %p149 = scmp.eq.s32.totalorder %s34, 7
      %p150 = por %p148, %p149
      %p151 = scmp.ne.s32.totalorder %s143, %s146
      %p152 = scmp.eq.s32.totalorder %s34, 0
      %p153 = por %p151, %p152
      %p154 = scmp.ne.s32.totalorder %s143, %s146
      %p155 = scmp.eq.s32.totalorder %s39, 7
      %p156 = por %p154, %p155
      %p157 = scmp.ne.s32.totalorder %s146, %s147
      %p158 = scmp.eq.s32.totalorder %s39, 0
      %p159 = por %p157, %p158
      %p160 = scmp.ne.s32.totalorder %s146, %s147
      %p161 = scmp.eq.s32.totalorder %s40, 7
      %p162 = por %p160, %p161
      %p164 = scmp.ne.s32.totalorder %s147, %s163
      %p165 = scmp.eq.s32.totalorder %s40, 0
      %p166 = por %p164, %p165
      %s167 = ssub.s32 %s43, %s52
      %p168 = scmp.eq.s32.totalorder %s167, 0
      %s170 = sadd.s32 %s169, 1
      %s171 = scalar_select %p168, %s169, %s170
      %p174 = pneg %p168
      %p175 = scmp.eq.s32.totalorder %s34, 7
      %p176 = por %p174, %p175
      %p177 = scmp.ne.s32.totalorder %s169, %s172
      %p178 = scmp.eq.s32.totalorder %s34, 0
      %p179 = por %p177, %p178
      %p180 = scmp.ne.s32.totalorder %s169, %s172
      %p181 = scmp.eq.s32.totalorder %s39, 7
      %p182 = por %p180, %p181
      %p183 = scmp.ne.s32.totalorder %s172, %s173
      %p184 = scmp.eq.s32.totalorder %s39, 0
      %p185 = por %p183, %p184
      %p186 = scmp.ne.s32.totalorder %s172, %s173
      %p187 = scmp.eq.s32.totalorder %s40, 7
      %p188 = por %p186, %p187
      %p190 = scmp.ne.s32.totalorder %s173, %s189
      %p191 = scmp.eq.s32.totalorder %s40, 0
      %p192 = por %p190, %p191
      %s193 = ssub.s32 %s43, %s52
      %p194 = scmp.eq.s32.totalorder %s193, 0
      %s196 = sadd.s32 %s195, 1
      %s197 = scalar_select %p194, %s195, %s196
      %p200 = pneg %p194
      %p201 = scmp.eq.s32.totalorder %s34, 7
      %p202 = por %p200, %p201
      %p203 = scmp.ne.s32.totalorder %s195, %s198
      %p204 = scmp.eq.s32.totalorder %s34, 0
      %p205 = por %p203, %p204
      %p206 = scmp.ne.s32.totalorder %s195, %s198
      %p207 = scmp.eq.s32.totalorder %s39, 7
      %p208 = por %p206, %p207
      %p209 = scmp.ne.s32.totalorder %s198, %s199
      %p210 = scmp.eq.s32.totalorder %s39, 0
      %p211 = por %p209, %p210
      %p212 = scmp.ne.s32.totalorder %s198, %s199
      %p213 = scmp.eq.s32.totalorder %s40, 7
      %p214 = por %p212, %p213
      %p216 = scmp.ne.s32.totalorder %s199, %s215
      %p217 = scmp.eq.s32.totalorder %s40, 0
      %p218 = por %p216, %p217
      %s219 = ssub.s32 %s43, %s52
      %p220 = scmp.eq.s32.totalorder %s219, 0
      %s222 = sadd.s32 %s221, 1
      %s223 = scalar_select %p220, %s221, %s222
      %p226 = pneg %p220
      %p227 = scmp.eq.s32.totalorder %s34, 7
      %p228 = por %p226, %p227
      %p229 = scmp.ne.s32.totalorder %s221, %s224
      %p230 = scmp.eq.s32.totalorder %s34, 0
      %p231 = por %p229, %p230
      %p232 = scmp.ne.s32.totalorder %s221, %s224
      %p233 = scmp.eq.s32.totalorder %s39, 7
      %p234 = por %p232, %p233
      %p235 = scmp.ne.s32.totalorder %s224, %s225
      %p236 = scmp.eq.s32.totalorder %s39, 0
      %p237 = por %p235, %p236
      %p238 = scmp.ne.s32.totalorder %s224, %s225
      %p239 = scmp.eq.s32.totalorder %s40, 7
      %p240 = por %p238, %p239
      %p242 = scmp.ne.s32.totalorder %s225, %s241
      %p243 = scmp.eq.s32.totalorder %s40, 0
      %p244 = por %p242, %p243
      %s245 = ssub.s32 %s41, %s60
      %s246 = ssub.s32 %s43, %s52
      %s247 = sor.u32 %s245, %s246
      %s248 = ssub.s32 %s42, %s56
      %s249 = sor.u32 %s247, %s248
      %p250 = scmp.eq.s32.totalorder %s249, 0
      %s252 = sadd.s32 %s251, 1
      %s253 = scalar_select %p250, %s251, %s252
      %p256 = pneg %p250
      %p257 = scmp.eq.s32.totalorder %s34, 7
      %p258 = por %p256, %p257
      %p259 = scmp.ne.s32.totalorder %s251, %s254
      %p260 = scmp.eq.s32.totalorder %s34, 0
      %p261 = por %p259, %p260
      %p262 = scmp.ne.s32.totalorder %s251, %s254
      %p263 = scmp.eq.s32.totalorder %s39, 7
      %p264 = por %p262, %p263
      %p265 = scmp.ne.s32.totalorder %s254, %s255
      %p266 = scmp.eq.s32.totalorder %s39, 0
      %p267 = por %p265, %p266
      %p268 = scmp.ne.s32.totalorder %s254, %s255
      %p269 = scmp.eq.s32.totalorder %s40, 7
      %p270 = por %p268, %p269
      %p272 = scmp.ne.s32.totalorder %s255, %s271
      %p273 = scmp.eq.s32.totalorder %s40, 0
      %p274 = por %p272, %p273
      %s275 = ssub.s32 %s41, %s60
      %s276 = ssub.s32 %s43, %s52
      %s277 = sor.u32 %s275, %s276
      %s278 = ssub.s32 %s42, %s56
      %s279 = sor.u32 %s277, %s278
      %p280 = scmp.eq.s32.totalorder %s279, 0
      %s282 = sadd.s32 %s281, 1
      %s283 = scalar_select %p280, %s281, %s282
      %p286 = pneg %p280
      %p287 = scmp.eq.s32.totalorder %s34, 7
      %p288 = por %p286, %p287
      %p289 = scmp.ne.s32.totalorder %s281, %s284
      %p290 = scmp.eq.s32.totalorder %s34, 0
      %p291 = por %p289, %p290
      %p292 = scmp.ne.s32.totalorder %s281, %s284
      %p293 = scmp.eq.s32.totalorder %s39, 7
      %p294 = por %p292, %p293
      %p295 = scmp.ne.s32.totalorder %s284, %s285
      %p296 = scmp.eq.s32.totalorder %s39, 0
      %p297 = por %p295, %p296
      %p298 = scmp.ne.s32.totalorder %s284, %s285
      %p299 = scmp.eq.s32.totalorder %s40, 7
      %p300 = por %p298, %p299
      %p302 = scmp.ne.s32.totalorder %s285, %s301
      %p303 = scmp.eq.s32.totalorder %s40, 0
      %p304 = por %p302, %p303
      %s305 = ssub.s32 %s41, %s60
      %s306 = ssub.s32 %s43, %s52
      %s307 = sor.u32 %s305, %s306
      %s308 = ssub.s32 %s42, %s56
      %s309 = sor.u32 %s307, %s308
      %p310 = scmp.eq.s32.totalorder %s309, 0
      %s312 = sadd.s32 %s311, 1
      %s313 = scalar_select %p310, %s311, %s312
      %p316 = pneg %p310
      %p317 = scmp.eq.s32.totalorder %s34, 7
      %p318 = por %p316, %p317
      %p319 = scmp.ne.s32.totalorder %s311, %s314
      %p320 = scmp.eq.s32.totalorder %s34, 0
      %p321 = por %p319, %p320
      %p322 = scmp.ne.s32.totalorder %s311, %s314
      %p323 = scmp.eq.s32.totalorder %s39, 7
      %p324 = por %p322, %p323
      %p325 = scmp.ne.s32.totalorder %s314, %s315
      %p326 = scmp.eq.s32.totalorder %s39, 0
      %p327 = por %p325, %p326
      %p328 = scmp.ne.s32.totalorder %s314, %s315
      %p329 = scmp.eq.s32.totalorder %s40, 7
      %p330 = por %p328, %p329
      %p332 = scmp.ne.s32.totalorder %s315, %s331
      %p333 = scmp.eq.s32.totalorder %s40, 0
      %p334 = por %p332, %p333
      %p335 = scmp.le.s32.totalorder 1, %s34
      %p336 = scmp.lt.s32.totalorder %s34, 9
      %p337 = pnand %p335, %p336
      %p338 = pneg %p337
      // Predicated region
      $region9: #{tpu_custom_call.1} parent=5 // pred_check
        _
      $region10: #{tpu_custom_call.1} parent=5 // pred_check_branch
        %340 = sbr.rel (%p337) target = $region12
      $region11: #{tpu_custom_call.1} parent=5 // pred_region
        %s341 = ssub.s32 %s34, 1
      $region12: #{tpu_custom_call.1} parent=5 // pred_fallthru
        _
      %p342 = scmp.lt.s32.totalorder %s34, 8
      // Predicated region
      $region13: #{tpu_custom_call.1} parent=5 // pred_check
        %p343 = pneg %p342
      $region14: #{tpu_custom_call.1} parent=5 // pred_check_branch
        %345 = sbr.rel (%p343) target = $region16
      $region15: #{tpu_custom_call.1} parent=5 // pred_region
        // Predicated region
        $region17: #{tpu_custom_call.1} parent=15 // pred_check
          %p346 = pneg %p75
        $region18: #{tpu_custom_call.1} parent=15 // pred_check_branch
          %348 = sbr.rel (%p346) target = $region20
        $region19: #{tpu_custom_call.1} parent=15 // pred_region
          %s349 = sand.u32 %s65, 1
          %s350 = scalar_lea.sflag [#allocation3], %s349
          %s351 = sand.u32 %s65, 1
          %s352 = smul.addr %s351, 8
          %s353 = scalar_lea.vmem [#allocation2], %s352
          %s355 = ssub.s32 128, 128
          %356 = vsyncadd %s350, %s355
          %s357 = sadd.s32 %s42, %s41
          %s358 = smul.addr %s357, 128
          %s359 = scalar_lea.hbm %s0, %s358
          %s361 = sshll.u32 %s353, 4
          %s362 = int_to_ptr.vmem [resolvable:$true] %s361
          %364 = dma.hbm_to_vmem [thread:$0]  %s359, 128, %s362, %s350
        $region20: #{tpu_custom_call.1} parent=15 // pred_fallthru
          _
        // Predicated region
        $region21: #{tpu_custom_call.1} parent=15 // pred_check
          %p365 = pneg %p101
        $region22: #{tpu_custom_call.1} parent=15 // pred_check_branch
          %367 = sbr.rel (%p365) target = $region24
        $region23: #{tpu_custom_call.1} parent=15 // pred_region
          %s368 = sand.u32 %s34, 1
          %s369 = scalar_lea.sflag [#allocation6], %s368
          %s370 = sand.u32 %s91, 1
          %s371 = smul.addr %s370, 16
          %s372 = scalar_lea.vmem [#allocation5], %s371
          %s374 = ssub.s32 256, 256
          %375 = vsyncadd %s369, %s374
          %s376 = smul.addr %s43, 4
          %s377 = smul.addr %s376, 64
          %s378 = scalar_lea.hbm %s1, %s377
          %s379 = sshll.u32 %s372, 4
          %s380 = int_to_ptr.vmem [resolvable:$true] %s379
          %385 = dma.hbm_to_vmem [thread:$0]  %s378, 256, %s380, %s369, 64, 64, 4
        $region24: #{tpu_custom_call.1} parent=15 // pred_fallthru
          _
        // Predicated region
        $region25: #{tpu_custom_call.1} parent=15 // pred_check
          %p386 = pneg %p127
        $region26: #{tpu_custom_call.1} parent=15 // pred_check_branch
          %388 = sbr.rel (%p386) target = $region28
        $region27: #{tpu_custom_call.1} parent=15 // pred_region
          %s389 = sand.u32 %s34, 1
          %s390 = scalar_lea.sflag [#allocation6], %s389
          %s391 = sand.u32 %s117, 1
          %s392 = smul.addr %s391, 16
          %s393 = scalar_lea.vmem [#allocation7], %s392
          %s395 = ssub.s32 256, 256
          %396 = vsyncadd %s390, %s395
          %s397 = smul.addr %s43, 4
          %s398 = smul.addr %s397, 64
          %s399 = scalar_lea.hbm %s2, %s398
          %s400 = sshll.u32 %s393, 4
          %s401 = int_to_ptr.vmem [resolvable:$true] %s400
          %406 = dma.hbm_to_vmem [thread:$0]  %s399, 256, %s401, %s390, 64, 64, 4
        $region28: #{tpu_custom_call.1} parent=15 // pred_fallthru
          _
        // Predicated region
        $region29: #{tpu_custom_call.1} parent=15 // pred_check
          %p407 = pneg %p153
        $region30: #{tpu_custom_call.1} parent=15 // pred_check_branch
          %409 = sbr.rel (%p407) target = $region32
        $region31: #{tpu_custom_call.1} parent=15 // pred_region
          %s410 = sand.u32 %s34, 1
          %s411 = scalar_lea.sflag [#allocation9], %s410
          %s412 = sand.u32 %s143, 1
          %s413 = smul.addr %s412, 16
          %s414 = scalar_lea.vmem [#allocation8], %s413
          %s416 = ssub.s32 256, 256
          %417 = vsyncadd %s411, %s416
          %s418 = smul.addr %s43, 4
          %s419 = smul.addr %s418, 64
          %s420 = scalar_lea.hbm %s3, %s419
          %s421 = sshll.u32 %s414, 4
          %s422 = int_to_ptr.vmem [resolvable:$true] %s421
          %427 = dma.hbm_to_vmem [thread:$0]  %s420, 256, %s422, %s411, 64, 64, 4
        $region32: #{tpu_custom_call.1} parent=15 // pred_fallthru
          _
        // Predicated region
        $region33: #{tpu_custom_call.1} parent=15 // pred_check
          %p428 = pneg %p179
        $region34: #{tpu_custom_call.1} parent=15 // pred_check_branch
          %430 = sbr.rel (%p428) target = $region36
        $region35: #{tpu_custom_call.1} parent=15 // pred_region
          %s431 = sand.u32 %s34, 1
          %s432 = scalar_lea.sflag [#allocation9], %s431
          %s433 = sand.u32 %s169, 1
          %s434 = scalar_lea.vmem [#allocation10], %s433
          %s436 = ssub.s32 16, 16
          %437 = vsyncadd %s432, %s436
          %s438 = smul.addr %s43, 16
          %s439 = scalar_lea.hbm %s4, %s438
          %s441 = sshll.u32 %s434, 4
          %s442 = int_to_ptr.vmem [resolvable:$true] %s441
          %444 = dma.hbm_to_vmem [thread:$0]  %s439, 16, %s442, %s432
        $region36: #{tpu_custom_call.1} parent=15 // pred_fallthru
          _
        // Predicated region
        $region37: #{tpu_custom_call.1} parent=15 // pred_check
          %p445 = pneg %p205
        $region38: #{tpu_custom_call.1} parent=15 // pred_check_branch
          %447 = sbr.rel (%p445) target = $region40
        $region39: #{tpu_custom_call.1} parent=15 // pred_region
          %s448 = sand.u32 %s34, 1
          %s449 = scalar_lea.sflag [#allocation12], %s448
          %s450 = sand.u32 %s195, 1
          %s451 = scalar_lea.vmem [#allocation11], %s450
          %s453 = ssub.s32 16, 16
          %454 = vsyncadd %s449, %s453
          %s455 = smul.addr %s43, 16
          %s456 = scalar_lea.hbm %s5, %s455
          %s458 = sshll.u32 %s451, 4
          %s459 = int_to_ptr.vmem [resolvable:$true] %s458
          %461 = dma.hbm_to_vmem [thread:$0]  %s456, 16, %s459, %s449
        $region40: #{tpu_custom_call.1} parent=15 // pred_fallthru
          _
        // Predicated region
        $region41: #{tpu_custom_call.1} parent=15 // pred_check
          %p462 = pneg %p231
        $region42: #{tpu_custom_call.1} parent=15 // pred_check_branch
          %464 = sbr.rel (%p462) target = $region44
        $region43: #{tpu_custom_call.1} parent=15 // pred_region
          %s465 = sand.u32 %s34, 1
          %s466 = scalar_lea.sflag [#allocation12], %s465
          %s467 = sand.u32 %s221, 1
          %s468 = scalar_lea.vmem [#allocation13], %s467
          %s470 = ssub.s32 16, 16
          %471 = vsyncadd %s466, %s470
          %s472 = smul.addr %s43, 16
          %s473 = scalar_lea.hbm %s6, %s472
          %s475 = sshll.u32 %s468, 4
          %s476 = int_to_ptr.vmem [resolvable:$true] %s475
          %478 = dma.hbm_to_vmem [thread:$0]  %s473, 16, %s476, %s466
        $region44: #{tpu_custom_call.1} parent=15 // pred_fallthru
          _
      $region16: #{tpu_custom_call.1} parent=5 // pred_fallthru
        _
      %p479 = scmp.le.s32.totalorder 1, %s34
      %p480 = scmp.lt.s32.totalorder %s34, 9
      %p481 = pnand %p479, %p480
      %p482 = pneg %p481
      // Predicated region
      $region45: #{tpu_custom_call.1} parent=5 // pred_check
        _
      $region46: #{tpu_custom_call.1} parent=5 // pred_check_branch
        %484 = sbr.rel (%p481) target = $region48
      $region47: #{tpu_custom_call.1} parent=5 // pred_region
        %s485 = ssub.s32 %s34, 1
        %s486 = sand.u32 %s68, 1
        %s487 = scalar_lea.sflag [#allocation3], %s486
        %s488 = sand.u32 %s68, 1
        %s489 = smul.addr %s488, 8
        %s490 = scalar_lea.vmem [#allocation2], %s489
        // Predicated region
        $region49: #{tpu_custom_call.1} parent=47 // pred_check
          %p491 = pneg %p81
        $region50: #{tpu_custom_call.1} parent=47 // pred_check_branch
          %493 = sbr.rel (%p491) target = $region52
        $region51: #{tpu_custom_call.1} parent=47 // pred_region
          %494 = dma.done %s487, 128
        $region52: #{tpu_custom_call.1} parent=47 // pred_fallthru
          _
        %s495 = sand.u32 %s39, 1
        %s496 = scalar_lea.sflag [#allocation6], %s495
        %s497 = sand.u32 %s94, 1
        %s498 = smul.addr %s497, 16
        %s499 = scalar_lea.vmem [#allocation5], %s498
        // Predicated region
        $region53: #{tpu_custom_call.1} parent=47 // pred_check
          %p500 = pneg %p107
        $region54: #{tpu_custom_call.1} parent=47 // pred_check_branch
          %502 = sbr.rel (%p500) target = $region56
        $region55: #{tpu_custom_call.1} parent=47 // pred_region
          %503 = dma.done %s496, 256
        $region56: #{tpu_custom_call.1} parent=47 // pred_fallthru
          _
        %s504 = sand.u32 %s39, 1
        %s505 = scalar_lea.sflag [#allocation6], %s504
        %s506 = sand.u32 %s120, 1
        %s507 = smul.addr %s506, 16
        %s508 = scalar_lea.vmem [#allocation7], %s507
        // Predicated region
        $region57: #{tpu_custom_call.1} parent=47 // pred_check
          %p509 = pneg %p133
        $region58: #{tpu_custom_call.1} parent=47 // pred_check_branch
          %511 = sbr.rel (%p509) target = $region60
        $region59: #{tpu_custom_call.1} parent=47 // pred_region
          %512 = dma.done %s505, 256
        $region60: #{tpu_custom_call.1} parent=47 // pred_fallthru
          _
        %s513 = sand.u32 %s39, 1
        %s514 = scalar_lea.sflag [#allocation9], %s513
        %s515 = sand.u32 %s146, 1
        %s516 = smul.addr %s515, 16
        %s517 = scalar_lea.vmem [#allocation8], %s516
        // Predicated region
        $region61: #{tpu_custom_call.1} parent=47 // pred_check
          %p518 = pneg %p159
        $region62: #{tpu_custom_call.1} parent=47 // pred_check_branch
          %520 = sbr.rel (%p518) target = $region64
        $region63: #{tpu_custom_call.1} parent=47 // pred_region
          %521 = dma.done %s514, 256
        $region64: #{tpu_custom_call.1} parent=47 // pred_fallthru
          _
        %s522 = sand.u32 %s39, 1
        %s523 = scalar_lea.sflag [#allocation9], %s522
        %s524 = sand.u32 %s172, 1
        %s525 = scalar_lea.vmem [#allocation10], %s524
        // Predicated region
        $region65: #{tpu_custom_call.1} parent=47 // pred_check
          %p526 = pneg %p185
        $region66: #{tpu_custom_call.1} parent=47 // pred_check_branch
          %528 = sbr.rel (%p526) target = $region68
        $region67: #{tpu_custom_call.1} parent=47 // pred_region
          %529 = dma.done %s523, 16
        $region68: #{tpu_custom_call.1} parent=47 // pred_fallthru
          _
        %s530 = sand.u32 %s39, 1
        %s531 = scalar_lea.sflag [#allocation12], %s530
        %s532 = sand.u32 %s198, 1
        %s533 = scalar_lea.vmem [#allocation11], %s532
        // Predicated region
        $region69: #{tpu_custom_call.1} parent=47 // pred_check
          %p534 = pneg %p211
        $region70: #{tpu_custom_call.1} parent=47 // pred_check_branch
          %536 = sbr.rel (%p534) target = $region72
        $region71: #{tpu_custom_call.1} parent=47 // pred_region
          %537 = dma.done %s531, 16
        $region72: #{tpu_custom_call.1} parent=47 // pred_fallthru
          _
        %s538 = sand.u32 %s39, 1
        %s539 = scalar_lea.sflag [#allocation12], %s538
        %s540 = sand.u32 %s224, 1
        %s541 = scalar_lea.vmem [#allocation13], %s540
        // Predicated region
        $region73: #{tpu_custom_call.1} parent=47 // pred_check
          %p542 = pneg %p237
        $region74: #{tpu_custom_call.1} parent=47 // pred_check_branch
          %544 = sbr.rel (%p542) target = $region76
        $region75: #{tpu_custom_call.1} parent=47 // pred_region
          %545 = dma.done %s539, 16
        $region76: #{tpu_custom_call.1} parent=47 // pred_fallthru
          _
        %s546 = sand.u32 %s68, 1
        %s547 = scalar_lea.sflag [#allocation3], %s546
        %s548 = sand.u32 %s68, 1
        %s549 = smul.addr %s548, 8
        %s550 = scalar_lea.vmem [#allocation2], %s549
        %p551 = pneg %p81
        %p552 = pneg %p78
        %s553 = sand.u32 %s39, 1
        %s554 = scalar_lea.sflag [#allocation6], %s553
        %s555 = sand.u32 %s94, 1
        %s556 = smul.addr %s555, 16
        %s557 = scalar_lea.vmem [#allocation5], %s556
        %p558 = pneg %p107
        %p559 = pneg %p104
        %s560 = sand.u32 %s39, 1
        %s561 = scalar_lea.sflag [#allocation6], %s560
        %s562 = sand.u32 %s120, 1
        %s563 = smul.addr %s562, 16
        %s564 = scalar_lea.vmem [#allocation7], %s563
        %p565 = pneg %p133
        %p566 = pneg %p130
        %s567 = sand.u32 %s39, 1
        %s568 = scalar_lea.sflag [#allocation9], %s567
        %s569 = sand.u32 %s146, 1
        %s570 = smul.addr %s569, 16
        %s571 = scalar_lea.vmem [#allocation8], %s570
        %p572 = pneg %p159
        %p573 = pneg %p156
        %s574 = sand.u32 %s39, 1
        %s575 = scalar_lea.sflag [#allocation9], %s574
        %s576 = sand.u32 %s172, 1
        %s577 = scalar_lea.vmem [#allocation10], %s576
        %p578 = pneg %p185
        %p579 = pneg %p182
        %s580 = sand.u32 %s39, 1
        %s581 = scalar_lea.sflag [#allocation12], %s580
        %s582 = sand.u32 %s198, 1
        %s583 = scalar_lea.vmem [#allocation11], %s582
        %p584 = pneg %p211
        %p585 = pneg %p208
        %s586 = sand.u32 %s39, 1
        %s587 = scalar_lea.sflag [#allocation12], %s586
        %s588 = sand.u32 %s224, 1
        %s589 = scalar_lea.vmem [#allocation13], %s588
        %p590 = pneg %p237
        %p591 = pneg %p234
        %p592 = pneg %p267
        %p593 = pneg %p264
        %s594 = sand.u32 %s254, 1
        %s595 = scalar_lea.sflag [#allocation4], %s594
        %s596 = sand.u32 %s254, 1
        %s597 = smul.addr %s596, 4
        %s598 = scalar_lea.vmem [#allocation14], %s597
        %p599 = pneg %p297
        %p600 = pneg %p294
        %s601 = sand.u32 %s39, 1
        %s602 = scalar_lea.sflag [#allocation16], %s601
        %s603 = sand.u32 %s284, 1
        %s604 = smul.addr %s603, 4
        %s605 = scalar_lea.vmem [#allocation15], %s604
        %p606 = pneg %p327
        %p607 = pneg %p324
        %s608 = sand.u32 %s39, 1
        %s609 = scalar_lea.sflag [#allocation16], %s608
        %s610 = sand.u32 %s314, 1
        %s611 = smul.addr %s610, 4
        %s612 = scalar_lea.vmem [#allocation17], %s611
        %v614 = vld [vmem:[%s490] sm:$0xff]
        %v615 = vpack.c.bf16 %v614, %v614
        %v616 = vld [vmem:[%s499] sm:$0xf]
        %v617 = vld [vmem:[%s499 + $0x4] sm:$0xf]
        %v618 = vld [vmem:[%s499 + $0x8] sm:$0xf]
        %v619 = vld [vmem:[%s499 + $0xc] sm:$0xf]
        %v620 = vld [vmem:[%s525] sm:$0x1]
        %v622 = vlaneseq
        %v623 = vshrl.u32 %v622, 7
        %v624 = vsub.s32 0, %v623
        %v625 = vrot.slane %v620, %v624
        %v631 = vunpack.c.l.b16 %v616
        %v632 = vunpack.c.l.b16 %v617
        %v633 = vunpack.c.l.b16 %v618
        %v634 = vunpack.c.l.b16 %v619
        %v635 = vpack.c.b16 %v632, %v631
        %v636 = vpack.c.b16 %v634, %v633
        %vm639 = vcmask 261120
        %v641 = vsel %vm639, %v615, 0
        %643 = vmatprep.subr.bf16.mxu0 0
        %644 = vmatpush1.bf16.msra.mxu0 %v635
        %645 = vmatprep.subr.bf16.mxu0 0
        %646 = vmatpush1.bf16.msra.mxu0 %v636
        %647 = vmatprep.subr.bf16.mxu0 0
        %648 = vmatpush1.bf16.msra.mxu0 0
        %649 = vmatprep.subr.bf16.mxu0 0
        %650 = vmatpush1.bf16.msra.mxu0 0
        %651 = vmatprep.subr.bf16.mxu0 0
        %652 = vmatpush1.bf16.msra.mxu0 0
        %653 = vmatprep.subr.bf16.mxu0 0
        %654 = vmatpush1.bf16.msra.mxu0 0
        %655 = vmatprep.subr.bf16.mxu0 0
        %656 = vmatpush1.bf16.msra.mxu0 0
        %657 = vmatprep.subr.bf16.mxu0 0
        %658 = vmatpush1.bf16.msra.mxu0 0
        %659 = vmatprep.subr.bf16.mxu0 0
        %660 = vmatpush1.bf16.msra.mxu0 0
        %661 = vmatprep.subr.bf16.mxu0 0
        %662 = vmatpush1.bf16.msra.mxu0 0
        %663 = vmatprep.subr.bf16.mxu0 0
        %664 = vmatpush1.bf16.msra.mxu0 0
        %665 = vmatprep.subr.bf16.mxu0 0
        %666 = vmatpush1.bf16.msra.mxu0 0
        %667 = vmatprep.subr.bf16.mxu0 0
        %668 = vmatpush1.bf16.msra.mxu0 0
        %669 = vmatprep.subr.bf16.mxu0 0
        %670 = vmatpush1.bf16.msra.mxu0 0
        %671 = vmatprep.subr.bf16.mxu0 0
        %672 = vmatpush1.bf16.msra.mxu0 0
        %673 = vmatprep.subr.bf16.mxu0 0
        %674 = vmatpush1.bf16.msra.mxu0 0
        %675 = vmatprep.mubr.bf16.mxu0 0
        %676 = vmatmul.mubr.bf16.gmra.mrb[0].mxu0 %v641
        %v677 = vpop.f32.mrb[0].mxu0
        %v678 = vadd.f32 %v625, %v677
        %v679 = vpop.f32.mrb[0].mxu0
        %v680 = vpop.f32.mrb[0].mxu0
        %v681 = vpop.f32.mrb[0].mxu0
        %682 = vdwg.mxu0
        %v683 = vld [vmem:[%s508] sm:$0xf]
        %v684 = vld [vmem:[%s508 + $0x4] sm:$0xf]
        %v685 = vld [vmem:[%s508 + $0x8] sm:$0xf]
        %v686 = vld [vmem:[%s508 + $0xc] sm:$0xf]
        %v687 = vld [vmem:[%s533] sm:$0x1]
        %v689 = vlaneseq
        %v690 = vshrl.u32 %v689, 7
        %v691 = vsub.s32 0, %v690
        %v692 = vrot.slane %v687, %v691
        %v698 = vunpack.c.l.b16 %v683
        %v699 = vunpack.c.l.b16 %v684
        %v700 = vunpack.c.l.b16 %v685
        %v701 = vunpack.c.l.b16 %v686
        %v702 = vpack.c.b16 %v699, %v698
        %v703 = vpack.c.b16 %v701, %v700
        %706 = vmatprep.subr.bf16.mxu0 0
        %707 = vmatpush1.bf16.msra.mxu0 %v702
        %708 = vmatprep.subr.bf16.mxu0 0
        %709 = vmatpush1.bf16.msra.mxu0 %v703
        %710 = vmatprep.subr.bf16.mxu0 0
        %711 = vmatpush1.bf16.msra.mxu0 0
        %712 = vmatprep.subr.bf16.mxu0 0
        %713 = vmatpush1.bf16.msra.mxu0 0
        %714 = vmatprep.subr.bf16.mxu0 0
        %715 = vmatpush1.bf16.msra.mxu0 0
        %716 = vmatprep.subr.bf16.mxu0 0
        %717 = vmatpush1.bf16.msra.mxu0 0
        %718 = vmatprep.subr.bf16.mxu0 0
        %719 = vmatpush1.bf16.msra.mxu0 0
        %720 = vmatprep.subr.bf16.mxu0 0
        %721 = vmatpush1.bf16.msra.mxu0 0
        %722 = vmatprep.subr.bf16.mxu0 0
        %723 = vmatpush1.bf16.msra.mxu0 0
        %724 = vmatprep.subr.bf16.mxu0 0
        %725 = vmatpush1.bf16.msra.mxu0 0
        %726 = vmatprep.subr.bf16.mxu0 0
        %727 = vmatpush1.bf16.msra.mxu0 0
        %728 = vmatprep.subr.bf16.mxu0 0
        %729 = vmatpush1.bf16.msra.mxu0 0
        %730 = vmatprep.subr.bf16.mxu0 0
        %731 = vmatpush1.bf16.msra.mxu0 0
        %732 = vmatprep.subr.bf16.mxu0 0
        %733 = vmatpush1.bf16.msra.mxu0 0
        %734 = vmatprep.subr.bf16.mxu0 0
        %735 = vmatpush1.bf16.msra.mxu0 0
        %736 = vmatprep.subr.bf16.mxu0 0
        %737 = vmatpush1.bf16.msra.mxu0 0
        %738 = vmatprep.mubr.bf16.mxu0 0
        %739 = vmatmul.mubr.bf16.gmra.mrb[0].mxu0 %v641
        %v740 = vpop.f32.mrb[0].mxu0
        %v741 = vadd.f32 %v692, %v740
        %v742 = vpop.f32.mrb[0].mxu0
        %v743 = vpop.f32.mrb[0].mxu0
        %v744 = vpop.f32.mrb[0].mxu0
        %745 = vdwg.mxu0
        %v746 = vld [vmem:[%s517] sm:$0xf]
        %v747 = vld [vmem:[%s517 + $0x4] sm:$0xf]
        %v748 = vld [vmem:[%s517 + $0x8] sm:$0xf]
        %v749 = vld [vmem:[%s517 + $0xc] sm:$0xf]
        %v750 = vld [vmem:[%s541] sm:$0x1]
        %v752 = vlaneseq
        %v753 = vshrl.u32 %v752, 7
        %v754 = vsub.s32 0, %v753
        %v755 = vrot.slane %v750, %v754
        %v761 = vunpack.c.l.b16 %v746
        %v762 = vunpack.c.l.b16 %v747
        %v763 = vunpack.c.l.b16 %v748
        %v764 = vunpack.c.l.b16 %v749
        %v765 = vpack.c.b16 %v762, %v761
        %v766 = vpack.c.b16 %v764, %v763
        %769 = vmatprep.subr.bf16.mxu0 0
        %770 = vmatpush1.bf16.msra.mxu0 %v765
        %771 = vmatprep.subr.bf16.mxu0 0
        %772 = vmatpush1.bf16.msra.mxu0 %v766
        %773 = vmatprep.subr.bf16.mxu0 0
        %774 = vmatpush1.bf16.msra.mxu0 0
        %775 = vmatprep.subr.bf16.mxu0 0
        %776 = vmatpush1.bf16.msra.mxu0 0
        %777 = vmatprep.subr.bf16.mxu0 0
        %778 = vmatpush1.bf16.msra.mxu0 0
        %779 = vmatprep.subr.bf16.mxu0 0
        %780 = vmatpush1.bf16.msra.mxu0 0
        %781 = vmatprep.subr.bf16.mxu0 0
        %782 = vmatpush1.bf16.msra.mxu0 0
        %783 = vmatprep.subr.bf16.mxu0 0
        %784 = vmatpush1.bf16.msra.mxu0 0
        %785 = vmatprep.subr.bf16.mxu0 0
        %786 = vmatpush1.bf16.msra.mxu0 0
        %787 = vmatprep.subr.bf16.mxu0 0
        %788 = vmatpush1.bf16.msra.mxu0 0
        %789 = vmatprep.subr.bf16.mxu0 0
        %790 = vmatpush1.bf16.msra.mxu0 0
        %791 = vmatprep.subr.bf16.mxu0 0
        %792 = vmatpush1.bf16.msra.mxu0 0
        %793 = vmatprep.subr.bf16.mxu0 0
        %794 = vmatpush1.bf16.msra.mxu0 0
        %795 = vmatprep.subr.bf16.mxu0 0
        %796 = vmatpush1.bf16.msra.mxu0 0
        %797 = vmatprep.subr.bf16.mxu0 0
        %798 = vmatpush1.bf16.msra.mxu0 0
        %799 = vmatprep.subr.bf16.mxu0 0
        %800 = vmatpush1.bf16.msra.mxu0 0
        %801 = vmatprep.mubr.bf16.mxu0 0
        %802 = vmatmul.mubr.bf16.gmra.mrb[0].mxu0 %v641
        %v803 = vpop.f32.mrb[0].mxu0
        %v804 = vadd.f32 %v755, %v803
        %v805 = vpop.f32.mrb[0].mxu0
        %v806 = vpop.f32.mrb[0].mxu0
        %v807 = vpop.f32.mrb[0].mxu0
        %808 = vdwg.mxu0
        %v809 = vpack.c.bf16 %v678, %v678
        %vm810 = vcmask 60416
        %811 = vst.msk [vmem:[%s598] sm:$0xf] %vm810, %v809
        %v812 = vpack.c.bf16 %v741, %v741
        %813 = vst.msk [vmem:[%s605] sm:$0xf] %vm810, %v812
        %v814 = vpack.c.bf16 %v804, %v804
        %815 = vst.msk [vmem:[%s612] sm:$0xf] %vm810, %v814
        %s816 = sand.u32 %s254, 1
        %s817 = scalar_lea.sflag [#allocation4], %s816
        %s818 = sand.u32 %s254, 1
        %s819 = smul.addr %s818, 4
        %s820 = scalar_lea.vmem [#allocation14], %s819
        %s821 = sand.u32 %s39, 1
        %s822 = scalar_lea.sflag [#allocation16], %s821
        %s823 = sand.u32 %s284, 1
        %s824 = smul.addr %s823, 4
        %s825 = scalar_lea.vmem [#allocation15], %s824
        %s826 = sand.u32 %s39, 1
        %s827 = scalar_lea.sflag [#allocation16], %s826
        %s828 = sand.u32 %s314, 1
        %s829 = smul.addr %s828, 4
        %s830 = scalar_lea.vmem [#allocation17], %s829
        // Predicated region
        $region77: #{tpu_custom_call.1} parent=47 // pred_check
          %p831 = pneg %p264
        $region78: #{tpu_custom_call.1} parent=47 // pred_check_branch
          %833 = sbr.rel (%p831) target = $region80
        $region79: #{tpu_custom_call.1} parent=47 // pred_region
          %s835 = ssub.s32 64, 64
          %836 = vsyncadd %s817, %s835
          %s837 = sadd.s32 %s45, %s46
          %s838 = smul.addr %s44, 4
          %s839 = sadd.s32 %s837, %s838
          %s840 = smul.addr %s839, 64
          %s841 = scalar_lea.hbm %s7, %s840
          %s843 = sshll.u32 %s820, 4
          %s844 = int_to_ptr.vmem [resolvable:$true] %s843
          %846 = dma.vmem_to_hbm [thread:$0]  %s844, 64, %s841, %s817
        $region80: #{tpu_custom_call.1} parent=47 // pred_fallthru
          _
        // Predicated region
        $region81: #{tpu_custom_call.1} parent=47 // pred_check
          %p847 = pneg %p294
        $region82: #{tpu_custom_call.1} parent=47 // pred_check_branch
          %849 = sbr.rel (%p847) target = $region84
        $region83: #{tpu_custom_call.1} parent=47 // pred_region
          %s851 = ssub.s32 64, 64
          %852 = vsyncadd %s822, %s851
          %s853 = sadd.s32 %s45, %s46
          %s854 = smul.addr %s44, 4
          %s855 = sadd.s32 %s853, %s854
          %s856 = smul.addr %s855, 64
          %s857 = scalar_lea.hbm %s8, %s856
          %s859 = sshll.u32 %s825, 4
          %s860 = int_to_ptr.vmem [resolvable:$true] %s859
          %862 = dma.vmem_to_hbm [thread:$0]  %s860, 64, %s857, %s822
        $region84: #{tpu_custom_call.1} parent=47 // pred_fallthru
          _
        // Predicated region
        $region85: #{tpu_custom_call.1} parent=47 // pred_check
          %p863 = pneg %p324
        $region86: #{tpu_custom_call.1} parent=47 // pred_check_branch
          %865 = sbr.rel (%p863) target = $region88
        $region87: #{tpu_custom_call.1} parent=47 // pred_region
          %s867 = ssub.s32 64, 64
          %868 = vsyncadd %s827, %s867
          %s869 = sadd.s32 %s45, %s46
          %s870 = smul.addr %s44, 4
          %s871 = sadd.s32 %s869, %s870
          %s872 = smul.addr %s871, 64
          %s873 = scalar_lea.hbm %s9, %s872
          %s875 = sshll.u32 %s830, 4
          %s876 = int_to_ptr.vmem [resolvable:$true] %s875
          %878 = dma.vmem_to_hbm [thread:$0]  %s876, 64, %s873, %s827
        $region88: #{tpu_custom_call.1} parent=47 // pred_fallthru
          _
      $region48: #{tpu_custom_call.1} parent=5 // pred_fallthru
        _
      %p879 = scmp.le.s32.totalorder 2, %s34
      // Predicated region
      $region89: #{tpu_custom_call.1} parent=5 // pred_check
        %p880 = pneg %p879
      $region90: #{tpu_custom_call.1} parent=5 // pred_check_branch
        %882 = sbr.rel (%p880) target = $region92
      $region91: #{tpu_custom_call.1} parent=5 // pred_region
        %s883 = ssub.s32 %s34, 2
        // Predicated region
        $region93: #{tpu_custom_call.1} parent=91 // pred_check
          %p884 = pneg %p270
        $region94: #{tpu_custom_call.1} parent=91 // pred_check_branch
          %886 = sbr.rel (%p884) target = $region96
        $region95: #{tpu_custom_call.1} parent=91 // pred_region
          %s887 = sand.u32 %s255, 1
          %s888 = scalar_lea.sflag [#allocation4], %s887
          %s889 = sand.u32 %s255, 1
          %s890 = smul.addr %s889, 4
          %s891 = scalar_lea.vmem [#allocation14], %s890
          %892 = dma.done %s888, 64
        $region96: #{tpu_custom_call.1} parent=91 // pred_fallthru
          _
        // Predicated region
        $region97: #{tpu_custom_call.1} parent=91 // pred_check
          %p893 = pneg %p300
        $region98: #{tpu_custom_call.1} parent=91 // pred_check_branch
          %895 = sbr.rel (%p893) target = $region100
        $region99: #{tpu_custom_call.1} parent=91 // pred_region
          %s896 = sand.u32 %s40, 1
          %s897 = scalar_lea.sflag [#allocation16], %s896
          %s898 = sand.u32 %s285, 1
          %s899 = smul.addr %s898, 4
          %s900 = scalar_lea.vmem [#allocation15], %s899
          %901 = dma.done %s897, 64
        $region100: #{tpu_custom_call.1} parent=91 // pred_fallthru
          _
        // Predicated region
        $region101: #{tpu_custom_call.1} parent=91 // pred_check
          %p902 = pneg %p330
        $region102: #{tpu_custom_call.1} parent=91 // pred_check_branch
          %904 = sbr.rel (%p902) target = $region104
        $region103: #{tpu_custom_call.1} parent=91 // pred_region
          %s905 = sand.u32 %s40, 1
          %s906 = scalar_lea.sflag [#allocation16], %s905
          %s907 = sand.u32 %s315, 1
          %s908 = smul.addr %s907, 4
          %s909 = scalar_lea.vmem [#allocation17], %s908
          %910 = dma.done %s906, 64
        $region104: #{tpu_custom_call.1} parent=91 // pred_fallthru
          _
      $region92: #{tpu_custom_call.1} parent=5 // pred_fallthru
        _
    $region6: #{tpu_custom_call.1} parent=1 // loop_footer
      %s38 = sadd.s32 1, %s34
    $region7: #{tpu_custom_call.1} parent=1 // loop_footer_branch
      %33 = sbr.rel target = $region3
    $region8: #{tpu_custom_call.1} parent=1 // loop_exit
      _
    %911 = vsyncpa [#allocation3], 1
    %s912 = scalar_lea.sflag [#allocation3], 1
    %913 = vsyncpa %s912, 1
    %914 = vsyncpa [#allocation6], 1
    %s915 = scalar_lea.sflag [#allocation6], 1
    %916 = vsyncpa %s915, 1
    %917 = vsyncpa [#allocation9], 1
    %s918 = scalar_lea.sflag [#allocation9], 1
    %919 = vsyncpa %s918, 1
    %920 = vsyncpa [#allocation12], 1
    %s921 = scalar_lea.sflag [#allocation12], 1
    %922 = vsyncpa %s921, 1
    %923 = vsyncpa [#allocation4], 1
    %s924 = scalar_lea.sflag [#allocation4], 1
    %925 = vsyncpa %s924, 1
    %926 = vsyncpa [#allocation16], 1
    %s927 = scalar_lea.sflag [#allocation16], 1
    %928 = vsyncpa %s927, 1

// kernel: tpu_custom_call.1
$region0: #{tpu_custom_call.1}
  #allocation0 [shape = 'u32[]', space=smem, size = 0x4, offset = 0x4, fixed_abs, tag = 'smem constant byte address 0x4 - core index']
  #allocation1 [shape = 'u32[144,128]{1,0:T(1,128)}', space=vmem, size = 0x12000, scoped, tag = 'internal scratch']
  %s0 = inlined_call_operand.hbm [shape: f32[2,8,32], index: 0, kind: input, shape index: {}]
  %s1 = inlined_call_operand.hbm [shape: bf16[4,32,8], index: 1, kind: input, shape index: {}]
  %s2 = inlined_call_operand.hbm [shape: bf16[4,32,8], index: 2, kind: input, shape index: {}]
  %s3 = inlined_call_operand.hbm [shape: bf16[4,32,8], index: 3, kind: input, shape index: {}]
  %s4 = inlined_call_operand.hbm [shape: f32[4,1,8], index: 4, kind: input, shape index: {}]
  %s5 = inlined_call_operand.hbm [shape: f32[4,1,8], index: 5, kind: input, shape index: {}]
  %s6 = inlined_call_operand.hbm [shape: f32[4,1,8], index: 6, kind: input, shape index: {}]
  %s7 = inlined_call_operand.hbm [shape: bf16[2,4,8,8], index: 7, kind: output, shape index: {0}]
  %s8 = inlined_call_operand.hbm [shape: bf16[2,4,8,8], index: 8, kind: output, shape index: {1}]
  %s9 = inlined_call_operand.hbm [shape: bf16[2,4,8,8], index: 9, kind: output, shape index: {2}]
  %10 = xla_tuple %s7, %s8, %s9
  %s11 = sld [smem:[#allocation0]]
  $region105: #{tpu_custom_call.1} parent=0
    _
  %s13 = ssub.s32 1, %s11
  %s14 = scalar_select 0, %s13, %s11
  $region1: #{tpu_custom_call.1} parent=0
    #allocation2 [shape = 'u8[8192]{0}', space=vmem, size = 0x2000, scoped, tag = 'input window, operand 0']
    #allocation3 [shape = 's32[2]{0}', space=sflag, size = 0x8, scoped, tag = 'scoped memory for tpu_custom_call.1']
    #allocation4 [shape = 's32[2]{0}', space=sflag, size = 0x8, scoped, tag = 'scoped memory for tpu_custom_call.1']
    #allocation5 [shape = 'u8[16384]{0}', space=vmem, size = 0x4000, scoped, tag = 'input window, operand 1']
    #allocation6 [shape = 's32[2]{0}', space=sflag, size = 0x8, scoped, tag = 'scoped memory for tpu_custom_call.1']
    #allocation7 [shape = 'u8[16384]{0}', space=vmem, size = 0x4000, scoped, tag = 'input window, operand 2']
    #allocation8 [shape = 'u8[16384]{0}', space=vmem, size = 0x4000, scoped, tag = 'input window, operand 3']
    #allocation9 [shape = 's32[2]{0}', space=sflag, size = 0x8, scoped, tag = 'scoped memory for tpu_custom_call.1']
    #allocation10 [shape = 'u8[1024]{0}', space=vmem, size = 0x400, scoped, tag = 'input window, operand 4']
    #allocation11 [shape = 'u8[1024]{0}', space=vmem, size = 0x400, scoped, tag = 'input window, operand 5']
    #allocation12 [shape = 's32[2]{0}', space=sflag, size = 0x8, scoped, tag = 'scoped memory for tpu_custom_call.1']
    #allocation13 [shape = 'u8[1024]{0}', space=vmem, size = 0x400, scoped, tag = 'input window, operand 6']
    #allocation14 [shape = 'u8[4096]{0}', space=vmem, size = 0x1000, scoped, tag = 'output window, operand 0']
    #allocation15 [shape = 'u8[4096]{0}', space=vmem, size = 0x1000, scoped, tag = 'output window, operand 1']
    #allocation16 [shape = 's32[2]{0}', space=sflag, size = 0x8, scoped, tag = 'scoped memory for tpu_custom_call.1']
    #allocation17 [shape = 'u8[4096]{0}', space=vmem, size = 0x1000, scoped, tag = 'output window, operand 2']
    %15 = vsyncpa [#allocation3], 0
    %s16 = scalar_lea.sflag [#allocation3], 1
    %17 = vsyncpa %s16, 0
    %18 = vsyncpa [#allocation6], 0
    %s19 = scalar_lea.sflag [#allocation6], 1
    %20 = vsyncpa %s19, 0
    %21 = vsyncpa [#allocation9], 0
    %s22 = scalar_lea.sflag [#allocation9], 1
    %23 = vsyncpa %s22, 0
    %24 = vsyncpa [#allocation12], 0
    %s25 = scalar_lea.sflag [#allocation12], 1
    %26 = vsyncpa %s25, 0
    %27 = vsyncpa [#allocation4], 0
    %s28 = scalar_lea.sflag [#allocation4], 1
    %29 = vsyncpa %s28, 0
    %30 = vsyncpa [#allocation16], 0
    %s31 = scalar_lea.sflag [#allocation16], 1
    %32 = vsyncpa %s31, 0
    loop: start=0, step=1, limit=10
    $region2: #{tpu_custom_call.1} parent=1 // loop_pre_header
      _
    $region3: #{tpu_custom_call.1} parent=1 // loop_header
      %s34 = sphi 0, %s38
      %p35 = scmp.ge.s32.totalorder %s34, 10
      %s41 = sphi 0, %s60
      %s42 = sphi 0, %s56
      %s43 = sphi 0, %s52
      %s44 = sphi 0, %s41
      %s45 = sphi 0, %s42
      %s46 = sphi 0, %s43
      %s47 = sphi 0, %s44
      %s48 = sphi 0, %s45
      %s49 = sphi 0, %s46
      %s65 = sphi 0, %s67
      %s68 = sphi 0, %s65
      %s69 = sphi 0, %s68
      %s85 = sphi 0, %s69
      %s91 = sphi 0, %s93
      %s94 = sphi 0, %s91
      %s95 = sphi 0, %s94
      %s111 = sphi 0, %s95
      %s117 = sphi 0, %s119
      %s120 = sphi 0, %s117
      %s121 = sphi 0, %s120
      %s137 = sphi 0, %s121
      %s143 = sphi 0, %s145
      %s146 = sphi 0, %s143
      %s147 = sphi 0, %s146
      %s163 = sphi 0, %s147
      %s169 = sphi 0, %s171
      %s172 = sphi 0, %s169
      %s173 = sphi 0, %s172
      %s189 = sphi 0, %s173
      %s195 = sphi 0, %s197
      %s198 = sphi 0, %s195
      %s199 = sphi 0, %s198
      %s215 = sphi 0, %s199
      %s221 = sphi 0, %s223
      %s224 = sphi 0, %s221
      %s225 = sphi 0, %s224
      %s241 = sphi 0, %s225
      %s251 = sphi 0, %s253
      %s254 = sphi 0, %s251
      %s255 = sphi 0, %s254
      %s271 = sphi 0, %s255
      %s281 = sphi 0, %s283
      %s284 = sphi 0, %s281
      %s285 = sphi 0, %s284
      %s301 = sphi 0, %s285
      %s311 = sphi 0, %s313
      %s314 = sphi 0, %s311
      %s315 = sphi 0, %s314
      %s331 = sphi 0, %s315
    $region4: #{tpu_custom_call.1} parent=1 // loop_header_branch
      %37 = sbr.rel (%p35) target = $region8
    $region5: #{tpu_custom_call.1} parent=1 // loop_body
      %s39 = ssub.s32 %s34, 1
      %s40 = ssub.s32 %s34, 2
      %s50 = sadd.s32 1, %s43
      %p51 = scmp.ge.s32.totalorder %s50, 4
      %s52 = scalar_select %p51, 0, %s50
      %s53 = sadd.s32 1, %s42
      %s54 = scalar_select %p51, %s53, %s42
      %p55 = scmp.ge.s32.totalorder %s54, 1
      %s56 = scalar_select %p55, 0, %s54
      %s57 = sadd.s32 1, %s41
      %s58 = scalar_select %p55, %s57, %s41
      %p59 = scmp.ge.s32.totalorder %s58, 2
      %s60 = scalar_select %p59, 0, %s58
      %s61 = ssub.s32 %s41, %s60
      %s62 = ssub.s32 %s42, %s56
      %s63 = sor.u32 %s61, %s62
      %p64 = scmp.eq.s32.totalorder %s63, 0
      %s66 = sadd.s32 %s65, 1
      %s67 = scalar_select %p64, %s65, %s66
      %p70 = pneg %p64
      %p71 = scmp.eq.s32.totalorder %s34, 7
      %p72 = por %p70, %p71
      %p73 = scmp.ne.s32.totalorder %s65, %s68
      %p74 = scmp.eq.s32.totalorder %s34, 0
      %p75 = por %p73, %p74
      %p76 = scmp.ne.s32.totalorder %s65, %s68
      %p77 = scmp.eq.s32.totalorder %s39, 7
      %p78 = por %p76, %p77
      %p79 = scmp.ne.s32.totalorder %s68, %s69
      %p80 = scmp.eq.s32.totalorder %s39, 0
      %p81 = por %p79, %p80
      %p82 = scmp.ne.s32.totalorder %s68, %s69
      %p83 = scmp.eq.s32.totalorder %s40, 7
      %p84 = por %p82, %p83
      %p86 = scmp.ne.s32.totalorder %s69, %s85
      %p87 = scmp.eq.s32.totalorder %s40, 0
      %p88 = por %p86, %p87
      %s89 = ssub.s32 %s43, %s52
      %p90 = scmp.eq.s32.totalorder %s89, 0
      %s92 = sadd.s32 %s91, 1
      %s93 = scalar_select %p90, %s91, %s92
      %p96 = pneg %p90
      %p97 = scmp.eq.s32.totalorder %s34, 7
      %p98 = por %p96, %p97
      %p99 = scmp.ne.s32.totalorder %s91, %s94
      %p100 = scmp.eq.s32.totalorder %s34, 0
      %p101 = por %p99, %p100
      %p102 = scmp.ne.s32.totalorder %s91, %s94
      %p103 = scmp.eq.s32.totalorder %s39, 7
      %p104 = por %p102, %p103
      %p105 = scmp.ne.s32.totalorder %s94, %s95
      %p106 = scmp.eq.s32.totalorder %s39, 0
      %p107 = por %p105, %p106
      %p108 = scmp.ne.s32.totalorder %s94, %s95
      %p109 = scmp.eq.s32.totalorder %s40, 7
      %p110 = por %p108, %p109
      %p112 = scmp.ne.s32.totalorder %s95, %s111
      %p113 = scmp.eq.s32.totalorder %s40, 0
      %p114 = por %p112, %p113
      %s115 = ssub.s32 %s43, %s52
      %p116 = scmp.eq.s32.totalorder %s115, 0
      %s118 = sadd.s32 %s117, 1
      %s119 = scalar_select %p116, %s117, %s118
      %p122 = pneg %p116
      %p123 = scmp.eq.s32.totalorder %s34, 7
      %p124 = por %p122, %p123
      %p125 = scmp.ne.s32.totalorder %s117, %s120
      %p126 = scmp.eq.s32.totalorder %s34, 0
      %p127 = por %p125, %p126
      %p128 = scmp.ne.s32.totalorder %s117, %s120
      %p129 = scmp.eq.s32.totalorder %s39, 7
      %p130 = por %p128, %p129
      %p131 = scmp.ne.s32.totalorder %s120, %s121
      %p132 = scmp.eq.s32.totalorder %s39, 0
      %p133 = por %p131, %p132
      %p134 = scmp.ne.s32.totalorder %s120, %s121
      %p135 = scmp.eq.s32.totalorder %s40, 7
      %p136 = por %p134, %p135
      %p138 = scmp.ne.s32.totalorder %s121, %s137
      %p139 = scmp.eq.s32.totalorder %s40, 0
      %p140 = por %p138, %p139
      %s141 = ssub.s32 %s43, %s52
      %p142 = scmp.eq.s32.totalorder %s141, 0
      %s144 = sadd.s32 %s143, 1
      %s145 = scalar_select %p142, %s143, %s144
      %p148 = pneg %p142
      %p149 = scmp.eq.s32.totalorder %s34, 7
      %p150 = por %p148, %p149
      %p151 = scmp.ne.s32.totalorder %s143, %s146
      %p152 = scmp.eq.s32.totalorder %s34, 0
      %p153 = por %p151, %p152
      %p154 = scmp.ne.s32.totalorder %s143, %s146
      %p155 = scmp.eq.s32.totalorder %s39, 7
      %p156 = por %p154, %p155
      %p157 = scmp.ne.s32.totalorder %s146, %s147
      %p158 = scmp.eq.s32.totalorder %s39, 0
      %p159 = por %p157, %p158
      %p160 = scmp.ne.s32.totalorder %s146, %s147
      %p161 = scmp.eq.s32.totalorder %s40, 7
      %p162 = por %p160, %p161
      %p164 = scmp.ne.s32.totalorder %s147, %s163
      %p165 = scmp.eq.s32.totalorder %s40, 0
      %p166 = por %p164, %p165
      %s167 = ssub.s32 %s43, %s52
      %p168 = scmp.eq.s32.totalorder %s167, 0
      %s170 = sadd.s32 %s169, 1
      %s171 = scalar_select %p168, %s169, %s170
      %p174 = pneg %p168
      %p175 = scmp.eq.s32.totalorder %s34, 7
      %p176 = por %p174, %p175
      %p177 = scmp.ne.s32.totalorder %s169, %s172
      %p178 = scmp.eq.s32.totalorder %s34, 0
      %p179 = por %p177, %p178
      %p180 = scmp.ne.s32.totalorder %s169, %s172
      %p181 = scmp.eq.s32.totalorder %s39, 7
      %p182 = por %p180, %p181
      %p183 = scmp.ne.s32.totalorder %s172, %s173
      %p184 = scmp.eq.s32.totalorder %s39, 0
      %p185 = por %p183, %p184
      %p186 = scmp.ne.s32.totalorder %s172, %s173
      %p187 = scmp.eq.s32.totalorder %s40, 7
      %p188 = por %p186, %p187
      %p190 = scmp.ne.s32.totalorder %s173, %s189
      %p191 = scmp.eq.s32.totalorder %s40, 0
      %p192 = por %p190, %p191
      %s193 = ssub.s32 %s43, %s52
      %p194 = scmp.eq.s32.totalorder %s193, 0
      %s196 = sadd.s32 %s195, 1
      %s197 = scalar_select %p194, %s195, %s196
      %p200 = pneg %p194
      %p201 = scmp.eq.s32.totalorder %s34, 7
      %p202 = por %p200, %p201
      %p203 = scmp.ne.s32.totalorder %s195, %s198
      %p204 = scmp.eq.s32.totalorder %s34, 0
      %p205 = por %p203, %p204
      %p206 = scmp.ne.s32.totalorder %s195, %s198
      %p207 = scmp.eq.s32.totalorder %s39, 7
      %p208 = por %p206, %p207
      %p209 = scmp.ne.s32.totalorder %s198, %s199
      %p210 = scmp.eq.s32.totalorder %s39, 0
      %p211 = por %p209, %p210
      %p212 = scmp.ne.s32.totalorder %s198, %s199
      %p213 = scmp.eq.s32.totalorder %s40, 7
      %p214 = por %p212, %p213
      %p216 = scmp.ne.s32.totalorder %s199, %s215
      %p217 = scmp.eq.s32.totalorder %s40, 0
      %p218 = por %p216, %p217
      %s219 = ssub.s32 %s43, %s52
      %p220 = scmp.eq.s32.totalorder %s219, 0
      %s222 = sadd.s32 %s221, 1
      %s223 = scalar_select %p220, %s221, %s222
      %p226 = pneg %p220
      %p227 = scmp.eq.s32.totalorder %s34, 7
      %p228 = por %p226, %p227
      %p229 = scmp.ne.s32.totalorder %s221, %s224
      %p230 = scmp.eq.s32.totalorder %s34, 0
      %p231 = por %p229, %p230
      %p232 = scmp.ne.s32.totalorder %s221, %s224
      %p233 = scmp.eq.s32.totalorder %s39, 7
      %p234 = por %p232, %p233
      %p235 = scmp.ne.s32.totalorder %s224, %s225
      %p236 = scmp.eq.s32.totalorder %s39, 0
      %p237 = por %p235, %p236
      %p238 = scmp.ne.s32.totalorder %s224, %s225
      %p239 = scmp.eq.s32.totalorder %s40, 7
      %p240 = por %p238, %p239
      %p242 = scmp.ne.s32.totalorder %s225, %s241
      %p243 = scmp.eq.s32.totalorder %s40, 0
      %p244 = por %p242, %p243
      %s245 = ssub.s32 %s41, %s60
      %s246 = ssub.s32 %s43, %s52
      %s247 = sor.u32 %s245, %s246
      %s248 = ssub.s32 %s42, %s56
      %s249 = sor.u32 %s247, %s248
      %p250 = scmp.eq.s32.totalorder %s249, 0
      %s252 = sadd.s32 %s251, 1
      %s253 = scalar_select %p250, %s251, %s252
      %p256 = pneg %p250
      %p257 = scmp.eq.s32.totalorder %s34, 7
      %p258 = por %p256, %p257
      %p259 = scmp.ne.s32.totalorder %s251, %s254
      %p260 = scmp.eq.s32.totalorder %s34, 0
      %p261 = por %p259, %p260
      %p262 = scmp.ne.s32.totalorder %s251, %s254
      %p263 = scmp.eq.s32.totalorder %s39, 7
      %p264 = por %p262, %p263
      %p265 = scmp.ne.s32.totalorder %s254, %s255
      %p266 = scmp.eq.s32.totalorder %s39, 0
      %p267 = por %p265, %p266
      %p268 = scmp.ne.s32.totalorder %s254, %s255
      %p269 = scmp.eq.s32.totalorder %s40, 7
      %p270 = por %p268, %p269
      %p272 = scmp.ne.s32.totalorder %s255, %s271
      %p273 = scmp.eq.s32.totalorder %s40, 0
      %p274 = por %p272, %p273
      %s275 = ssub.s32 %s41, %s60
      %s276 = ssub.s32 %s43, %s52
      %s277 = sor.u32 %s275, %s276
      %s278 = ssub.s32 %s42, %s56
      %s279 = sor.u32 %s277, %s278
      %p280 = scmp.eq.s32.totalorder %s279, 0
      %s282 = sadd.s32 %s281, 1
      %s283 = scalar_select %p280, %s281, %s282
      %p286 = pneg %p280
      %p287 = scmp.eq.s32.totalorder %s34, 7
      %p288 = por %p286, %p287
      %p289 = scmp.ne.s32.totalorder %s281, %s284
      %p290 = scmp.eq.s32.totalorder %s34, 0
      %p291 = por %p289, %p290
      %p292 = scmp.ne.s32.totalorder %s281, %s284
      %p293 = scmp.eq.s32.totalorder %s39, 7
      %p294 = por %p292, %p293
      %p295 = scmp.ne.s32.totalorder %s284, %s285
      %p296 = scmp.eq.s32.totalorder %s39, 0
      %p297 = por %p295, %p296
      %p298 = scmp.ne.s32.totalorder %s284, %s285
      %p299 = scmp.eq.s32.totalorder %s40, 7
      %p300 = por %p298, %p299
      %p302 = scmp.ne.s32.totalorder %s285, %s301
      %p303 = scmp.eq.s32.totalorder %s40, 0
      %p304 = por %p302, %p303
      %s305 = ssub.s32 %s41, %s60
      %s306 = ssub.s32 %s43, %s52
      %s307 = sor.u32 %s305, %s306
      %s308 = ssub.s32 %s42, %s56
      %s309 = sor.u32 %s307, %s308
      %p310 = scmp.eq.s32.totalorder %s309, 0
      %s312 = sadd.s32 %s311, 1
      %s313 = scalar_select %p310, %s311, %s312
      %p316 = pneg %p310
      %p317 = scmp.eq.s32.totalorder %s34, 7
      %p318 = por %p316, %p317
      %p319 = scmp.ne.s32.totalorder %s311, %s314
      %p320 = scmp.eq.s32.totalorder %s34, 0
      %p321 = por %p319, %p320
      %p322 = scmp.ne.s32.totalorder %s311, %s314
      %p323 = scmp.eq.s32.totalorder %s39, 7
      %p324 = por %p322, %p323
      %p325 = scmp.ne.s32.totalorder %s314, %s315
      %p326 = scmp.eq.s32.totalorder %s39, 0
      %p327 = por %p325, %p326
      %p328 = scmp.ne.s32.totalorder %s314, %s315
      %p329 = scmp.eq.s32.totalorder %s40, 7
      %p330 = por %p328, %p329
      %p332 = scmp.ne.s32.totalorder %s315, %s331
      %p333 = scmp.eq.s32.totalorder %s40, 0
      %p334 = por %p332, %p333
      %p335 = scmp.le.s32.totalorder 1, %s34
      %p336 = scmp.lt.s32.totalorder %s34, 9
      %p337 = pnand %p335, %p336
      %p338 = pneg %p337
      // Predicated region
      $region9: #{tpu_custom_call.1} parent=5 // pred_check
        _
      $region10: #{tpu_custom_call.1} parent=5 // pred_check_branch
        %340 = sbr.rel (%p337) target = $region12
      $region11: #{tpu_custom_call.1} parent=5 // pred_region
        %s341 = ssub.s32 %s34, 1
      $region12: #{tpu_custom_call.1} parent=5 // pred_fallthru
        _
      %p342 = scmp.lt.s32.totalorder %s34, 8
      // Predicated region
      $region13: #{tpu_custom_call.1} parent=5 // pred_check
        %p343 = pneg %p342
      $region14: #{tpu_custom_call.1} parent=5 // pred_check_branch
        %345 = sbr.rel (%p343) target = $region16
      $region15: #{tpu_custom_call.1} parent=5 // pred_region
        // Predicated region
        $region17: #{tpu_custom_call.1} parent=15 // pred_check
          %p346 = pneg %p75
        $region18: #{tpu_custom_call.1} parent=15 // pred_check_branch
          %348 = sbr.rel (%p346) target = $region20
        $region19: #{tpu_custom_call.1} parent=15 // pred_region
          %s349 = sand.u32 %s65, 1
          %s350 = scalar_lea.sflag [#allocation3], %s349
          %s351 = sand.u32 %s65, 1
          %s352 = smul.addr %s351, 8
          %s353 = scalar_lea.vmem [#allocation2], %s352
          %s355 = ssub.s32 128, 128
          %356 = vsyncadd %s350, %s355
          %s357 = sadd.s32 %s42, %s41
          %s358 = smul.addr %s357, 128
          %s359 = scalar_lea.hbm %s0, %s358
          %s361 = sshll.u32 %s353, 4
          %s362 = int_to_ptr.vmem [resolvable:$true] %s361
          %364 = dma.hbm_to_vmem [thread:$0]  %s359, 128, %s362, %s350
        $region20: #{tpu_custom_call.1} parent=15 // pred_fallthru
          _
        // Predicated region
        $region21: #{tpu_custom_call.1} parent=15 // pred_check
          %p365 = pneg %p101
        $region22: #{tpu_custom_call.1} parent=15 // pred_check_branch
          %367 = sbr.rel (%p365) target = $region24
        $region23: #{tpu_custom_call.1} parent=15 // pred_region
          %s368 = sand.u32 %s34, 1
          %s369 = scalar_lea.sflag [#allocation6], %s368
          %s370 = sand.u32 %s91, 1
          %s371 = smul.addr %s370, 16
          %s372 = scalar_lea.vmem [#allocation5], %s371
          %s374 = ssub.s32 256, 256
          %375 = vsyncadd %s369, %s374
          %s376 = smul.addr %s43, 4
          %s377 = smul.addr %s376, 64
          %s378 = scalar_lea.hbm %s1, %s377
          %s379 = sshll.u32 %s372, 4
          %s380 = int_to_ptr.vmem [resolvable:$true] %s379
          %385 = dma.hbm_to_vmem [thread:$0]  %s378, 256, %s380, %s369, 64, 64, 4
        $region24: #{tpu_custom_call.1} parent=15 // pred_fallthru
          _
        // Predicated region
        $region25: #{tpu_custom_call.1} parent=15 // pred_check
          %p386 = pneg %p127
        $region26: #{tpu_custom_call.1} parent=15 // pred_check_branch
          %388 = sbr.rel (%p386) target = $region28
        $region27: #{tpu_custom_call.1} parent=15 // pred_region
          %s389 = sand.u32 %s34, 1
          %s390 = scalar_lea.sflag [#allocation6], %s389
          %s391 = sand.u32 %s117, 1
          %s392 = smul.addr %s391, 16
          %s393 = scalar_lea.vmem [#allocation7], %s392
          %s395 = ssub.s32 256, 256
          %396 = vsyncadd %s390, %s395
          %s397 = smul.addr %s43, 4
          %s398 = smul.addr %s397, 64
          %s399 = scalar_lea.hbm %s2, %s398
          %s400 = sshll.u32 %s393, 4
          %s401 = int_to_ptr.vmem [resolvable:$true] %s400
          %406 = dma.hbm_to_vmem [thread:$0]  %s399, 256, %s401, %s390, 64, 64, 4
        $region28: #{tpu_custom_call.1} parent=15 // pred_fallthru
          _
        // Predicated region
        $region29: #{tpu_custom_call.1} parent=15 // pred_check
          %p407 = pneg %p153
        $region30: #{tpu_custom_call.1} parent=15 // pred_check_branch
          %409 = sbr.rel (%p407) target = $region32
        $region31: #{tpu_custom_call.1} parent=15 // pred_region
          %s410 = sand.u32 %s34, 1
          %s411 = scalar_lea.sflag [#allocation9], %s410
          %s412 = sand.u32 %s143, 1
          %s413 = smul.addr %s412, 16
          %s414 = scalar_lea.vmem [#allocation8], %s413
          %s416 = ssub.s32 256, 256
          %417 = vsyncadd %s411, %s416
          %s418 = smul.addr %s43, 4
          %s419 = smul.addr %s418, 64
          %s420 = scalar_lea.hbm %s3, %s419
          %s421 = sshll.u32 %s414, 4
          %s422 = int_to_ptr.vmem [resolvable:$true] %s421
          %427 = dma.hbm_to_vmem [thread:$0]  %s420, 256, %s422, %s411, 64, 64, 4
        $region32: #{tpu_custom_call.1} parent=15 // pred_fallthru
          _
        // Predicated region
        $region33: #{tpu_custom_call.1} parent=15 // pred_check
          %p428 = pneg %p179
        $region34: #{tpu_custom_call.1} parent=15 // pred_check_branch
          %430 = sbr.rel (%p428) target = $region36
        $region35: #{tpu_custom_call.1} parent=15 // pred_region
          %s431 = sand.u32 %s34, 1
          %s432 = scalar_lea.sflag [#allocation9], %s431
          %s433 = sand.u32 %s169, 1
          %s434 = scalar_lea.vmem [#allocation10], %s433
          %s436 = ssub.s32 16, 16
          %437 = vsyncadd %s432, %s436
          %s438 = smul.addr %s43, 16
          %s439 = scalar_lea.hbm %s4, %s438
          %s441 = sshll.u32 %s434, 4
          %s442 = int_to_ptr.vmem [resolvable:$true] %s441
          %444 = dma.hbm_to_vmem [thread:$0]  %s439, 16, %s442, %s432
        $region36: #{tpu_custom_call.1} parent=15 // pred_fallthru
          _
        // Predicated region
        $region37: #{tpu_custom_call.1} parent=15 // pred_check
          %p445 = pneg %p205
        $region38: #{tpu_custom_call.1} parent=15 // pred_check_branch
          %447 = sbr.rel (%p445) target = $region40
        $region39: #{tpu_custom_call.1} parent=15 // pred_region
          %s448 = sand.u32 %s34, 1
          %s449 = scalar_lea.sflag [#allocation12], %s448
          %s450 = sand.u32 %s195, 1
          %s451 = scalar_lea.vmem [#allocation11], %s450
          %s453 = ssub.s32 16, 16
          %454 = vsyncadd %s449, %s453
          %s455 = smul.addr %s43, 16
          %s456 = scalar_lea.hbm %s5, %s455
          %s458 = sshll.u32 %s451, 4
          %s459 = int_to_ptr.vmem [resolvable:$true] %s458
          %461 = dma.hbm_to_vmem [thread:$0]  %s456, 16, %s459, %s449
        $region40: #{tpu_custom_call.1} parent=15 // pred_fallthru
          _
        // Predicated region
        $region41: #{tpu_custom_call.1} parent=15 // pred_check
          %p462 = pneg %p231
        $region42: #{tpu_custom_call.1} parent=15 // pred_check_branch
          %464 = sbr.rel (%p462) target = $region44
        $region43: #{tpu_custom_call.1} parent=15 // pred_region
          %s465 = sand.u32 %s34, 1
          %s466 = scalar_lea.sflag [#allocation12], %s465
          %s467 = sand.u32 %s221, 1
          %s468 = scalar_lea.vmem [#allocation13], %s467
          %s470 = ssub.s32 16, 16
          %471 = vsyncadd %s466, %s470
          %s472 = smul.addr %s43, 16
          %s473 = scalar_lea.hbm %s6, %s472
          %s475 = sshll.u32 %s468, 4
          %s476 = int_to_ptr.vmem [resolvable:$true] %s475
          %478 = dma.hbm_to_vmem [thread:$0]  %s473, 16, %s476, %s466
        $region44: #{tpu_custom_call.1} parent=15 // pred_fallthru
          _
      $region16: #{tpu_custom_call.1} parent=5 // pred_fallthru
        _
      %p479 = scmp.le.s32.totalorder 1, %s34
      %p480 = scmp.lt.s32.totalorder %s34, 9
      %p481 = pnand %p479, %p480
      %p482 = pneg %p481
      // Predicated region
      $region45: #{tpu_custom_call.1} parent=5 // pred_check
        _
      $region46: #{tpu_custom_call.1} parent=5 // pred_check_branch
        %484 = sbr.rel (%p481) target = $region48
      $region47: #{tpu_custom_call.1} parent=5 // pred_region
        %s485 = ssub.s32 %s34, 1
        %s486 = sand.u32 %s68, 1
        %s487 = scalar_lea.sflag [#allocation3], %s486
        %s488 = sand.u32 %s68, 1
        %s489 = smul.addr %s488, 8
        %s490 = scalar_lea.vmem [#allocation2], %s489
        // Predicated region
        $region49: #{tpu_custom_call.1} parent=47 // pred_check
          %p491 = pneg %p81
        $region50: #{tpu_custom_call.1} parent=47 // pred_check_branch
          %493 = sbr.rel (%p491) target = $region52
        $region51: #{tpu_custom_call.1} parent=47 // pred_region
          %494 = dma.done %s487, 128
        $region52: #{tpu_custom_call.1} parent=47 // pred_fallthru
          _
        %s495 = sand.u32 %s39, 1
        %s496 = scalar_lea.sflag [#allocation6], %s495
        %s497 = sand.u32 %s94, 1
        %s498 = smul.addr %s497, 16
        %s499 = scalar_lea.vmem [#allocation5], %s498
        // Predicated region
        $region53: #{tpu_custom_call.1} parent=47 // pred_check
          %p500 = pneg %p107
        $region54: #{tpu_custom_call.1} parent=47 // pred_check_branch
          %502 = sbr.rel (%p500) target = $region56
        $region55: #{tpu_custom_call.1} parent=47 // pred_region
          %503 = dma.done %s496, 256
        $region56: #{tpu_custom_call.1} parent=47 // pred_fallthru
          _
        %s504 = sand.u32 %s39, 1
        %s505 = scalar_lea.sflag [#allocation6], %s504
        %s506 = sand.u32 %s120, 1
        %s507 = smul.addr %s506, 16
        %s508 = scalar_lea.vmem [#allocation7], %s507
        // Predicated region
        $region57: #{tpu_custom_call.1} parent=47 // pred_check
          %p509 = pneg %p133
        $region58: #{tpu_custom_call.1} parent=47 // pred_check_branch
          %511 = sbr.rel (%p509) target = $region60
        $region59: #{tpu_custom_call.1} parent=47 // pred_region
          %512 = dma.done %s505, 256
        $region60: #{tpu_custom_call.1} parent=47 // pred_fallthru
          _
        %s513 = sand.u32 %s39, 1
        %s514 = scalar_lea.sflag [#allocation9], %s513
        %s515 = sand.u32 %s146, 1
        %s516 = smul.addr %s515, 16
        %s517 = scalar_lea.vmem [#allocation8], %s516
        // Predicated region
        $region61: #{tpu_custom_call.1} parent=47 // pred_check
          %p518 = pneg %p159
        $region62: #{tpu_custom_call.1} parent=47 // pred_check_branch
          %520 = sbr.rel (%p518) target = $region64
        $region63: #{tpu_custom_call.1} parent=47 // pred_region
          %521 = dma.done %s514, 256
        $region64: #{tpu_custom_call.1} parent=47 // pred_fallthru
          _
        %s522 = sand.u32 %s39, 1
        %s523 = scalar_lea.sflag [#allocation9], %s522
        %s524 = sand.u32 %s172, 1
        %s525 = scalar_lea.vmem [#allocation10], %s524
        // Predicated region
        $region65: #{tpu_custom_call.1} parent=47 // pred_check
          %p526 = pneg %p185
        $region66: #{tpu_custom_call.1} parent=47 // pred_check_branch
          %528 = sbr.rel (%p526) target = $region68
        $region67: #{tpu_custom_call.1} parent=47 // pred_region
          %529 = dma.done %s523, 16
        $region68: #{tpu_custom_call.1} parent=47 // pred_fallthru
          _
        %s530 = sand.u32 %s39, 1
        %s531 = scalar_lea.sflag [#allocation12], %s530
        %s532 = sand.u32 %s198, 1
        %s533 = scalar_lea.vmem [#allocation11], %s532
        // Predicated region
        $region69: #{tpu_custom_call.1} parent=47 // pred_check
          %p534 = pneg %p211
        $region70: #{tpu_custom_call.1} parent=47 // pred_check_branch
          %536 = sbr.rel (%p534) target = $region72
        $region71: #{tpu_custom_call.1} parent=47 // pred_region
          %537 = dma.done %s531, 16
        $region72: #{tpu_custom_call.1} parent=47 // pred_fallthru
          _
        %s538 = sand.u32 %s39, 1
        %s539 = scalar_lea.sflag [#allocation12], %s538
        %s540 = sand.u32 %s224, 1
        %s541 = scalar_lea.vmem [#allocation13], %s540
        // Predicated region
        $region73: #{tpu_custom_call.1} parent=47 // pred_check
          %p542 = pneg %p237
        $region74: #{tpu_custom_call.1} parent=47 // pred_check_branch
          %544 = sbr.rel (%p542) target = $region76
        $region75: #{tpu_custom_call.1} parent=47 // pred_region
          %545 = dma.done %s539, 16
        $region76: #{tpu_custom_call.1} parent=47 // pred_fallthru
          _
        %s546 = sand.u32 %s68, 1
        %s547 = scalar_lea.sflag [#allocation3], %s546
        %s548 = sand.u32 %s68, 1
        %s549 = smul.addr %s548, 8
        %s550 = scalar_lea.vmem [#allocation2], %s549
        %p551 = pneg %p81
        %p552 = pneg %p78
        %s553 = sand.u32 %s39, 1
        %s554 = scalar_lea.sflag [#allocation6], %s553
        %s555 = sand.u32 %s94, 1
        %s556 = smul.addr %s555, 16
        %s557 = scalar_lea.vmem [#allocation5], %s556
        %p558 = pneg %p107
        %p559 = pneg %p104
        %s560 = sand.u32 %s39, 1
        %s561 = scalar_lea.sflag [#allocation6], %s560
        %s562 = sand.u32 %s120, 1
        %s563 = smul.addr %s562, 16
        %s564 = scalar_lea.vmem [#allocation7], %s563
        %p565 = pneg %p133
        %p566 = pneg %p130
        %s567 = sand.u32 %s39, 1
        %s568 = scalar_lea.sflag [#allocation9], %s567
        %s569 = sand.u32 %s146, 1
        %s570 = smul.addr %s569, 16
        %s571 = scalar_lea.vmem [#allocation8], %s570
        %p572 = pneg %p159
        %p573 = pneg %p156
        %s574 = sand.u32 %s39, 1
        %s575 = scalar_lea.sflag [#allocation9], %s574
        %s576 = sand.u32 %s172, 1
        %s577 = scalar_lea.vmem [#allocation10], %s576
        %p578 = pneg %p185
        %p579 = pneg %p182
        %s580 = sand.u32 %s39, 1
        %s581 = scalar_lea.sflag [#allocation12], %s580
        %s582 = sand.u32 %s198, 1
        %s583 = scalar_lea.vmem [#allocation11], %s582
        %p584 = pneg %p211
        %p585 = pneg %p208
        %s586 = sand.u32 %s39, 1
        %s587 = scalar_lea.sflag [#allocation12], %s586
        %s588 = sand.u32 %s224, 1
        %s589 = scalar_lea.vmem [#allocation13], %s588
        %p590 = pneg %p237
        %p591 = pneg %p234
        %p592 = pneg %p267
        %p593 = pneg %p264
        %s594 = sand.u32 %s254, 1
        %s595 = scalar_lea.sflag [#allocation4], %s594
        %s596 = sand.u32 %s254, 1
        %s597 = smul.addr %s596, 4
        %s598 = scalar_lea.vmem [#allocation14], %s597
        %p599 = pneg %p297
        %p600 = pneg %p294
        %s601 = sand.u32 %s39, 1
        %s602 = scalar_lea.sflag [#allocation16], %s601
        %s603 = sand.u32 %s284, 1
        %s604 = smul.addr %s603, 4
        %s605 = scalar_lea.vmem [#allocation15], %s604
        %p606 = pneg %p327
        %p607 = pneg %p324
        %s608 = sand.u32 %s39, 1
        %s609 = scalar_lea.sflag [#allocation16], %s608
        %s610 = sand.u32 %s314, 1
        %s611 = smul.addr %s610, 4
        %s612 = scalar_lea.vmem [#allocation17], %s611
        %v614 = vld [vmem:[%s490] sm:$0xff]
        %v615 = vpack.c.bf16 %v614, %v614
        %v616 = vld [vmem:[%s499] sm:$0xf]
        %v617 = vld [vmem:[%s499 + $0x4] sm:$0xf]
        %v618 = vld [vmem:[%s499 + $0x8] sm:$0xf]
        %v619 = vld [vmem:[%s499 + $0xc] sm:$0xf]
        %v620 = vld [vmem:[%s525] sm:$0x1]
        %v622 = vlaneseq
        %v623 = vshrl.u32 %v622, 7
        %v624 = vsub.s32 0, %v623
        %v625 = vrot.slane %v620, %v624
        %v631 = vunpack.c.l.b16 %v616
        %v632 = vunpack.c.l.b16 %v617
        %v633 = vunpack.c.l.b16 %v618
        %v634 = vunpack.c.l.b16 %v619
        %v635 = vpack.c.b16 %v632, %v631
        %v636 = vpack.c.b16 %v634, %v633
        %vm639 = vcmask 261120
        %v641 = vsel %vm639, %v615, 0
        %643 = vmatprep.subr.bf16.mxu0 0
        %644 = vmatpush1.bf16.msra.mxu0 %v635
        %645 = vmatprep.subr.bf16.mxu0 0
        %646 = vmatpush1.bf16.msra.mxu0 %v636
        %647 = vmatprep.subr.bf16.mxu0 0
        %648 = vmatpush1.bf16.msra.mxu0 0
        %649 = vmatprep.subr.bf16.mxu0 0
        %650 = vmatpush1.bf16.msra.mxu0 0
        %651 = vmatprep.subr.bf16.mxu0 0
        %652 = vmatpush1.bf16.msra.mxu0 0
        %653 = vmatprep.subr.bf16.mxu0 0
        %654 = vmatpush1.bf16.msra.mxu0 0
        %655 = vmatprep.subr.bf16.mxu0 0
        %656 = vmatpush1.bf16.msra.mxu0 0
        %657 = vmatprep.subr.bf16.mxu0 0
        %658 = vmatpush1.bf16.msra.mxu0 0
        %659 = vmatprep.subr.bf16.mxu0 0
        %660 = vmatpush1.bf16.msra.mxu0 0
        %661 = vmatprep.subr.bf16.mxu0 0
        %662 = vmatpush1.bf16.msra.mxu0 0
        %663 = vmatprep.subr.bf16.mxu0 0
        %664 = vmatpush1.bf16.msra.mxu0 0
        %665 = vmatprep.subr.bf16.mxu0 0
        %666 = vmatpush1.bf16.msra.mxu0 0
        %667 = vmatprep.subr.bf16.mxu0 0
        %668 = vmatpush1.bf16.msra.mxu0 0
        %669 = vmatprep.subr.bf16.mxu0 0
        %670 = vmatpush1.bf16.msra.mxu0 0
        %671 = vmatprep.subr.bf16.mxu0 0
        %672 = vmatpush1.bf16.msra.mxu0 0
        %673 = vmatprep.subr.bf16.mxu0 0
        %674 = vmatpush1.bf16.msra.mxu0 0
        %675 = vmatprep.mubr.bf16.mxu0 0
        %676 = vmatmul.mubr.bf16.gmra.mrb[0].mxu0 %v641
        %v677 = vpop.f32.mrb[0].mxu0
        %v678 = vadd.f32 %v625, %v677
        %v679 = vpop.f32.mrb[0].mxu0
        %v680 = vpop.f32.mrb[0].mxu0
        %v681 = vpop.f32.mrb[0].mxu0
        %682 = vdwg.mxu0
        %v683 = vld [vmem:[%s508] sm:$0xf]
        %v684 = vld [vmem:[%s508 + $0x4] sm:$0xf]
        %v685 = vld [vmem:[%s508 + $0x8] sm:$0xf]
        %v686 = vld [vmem:[%s508 + $0xc] sm:$0xf]
        %v687 = vld [vmem:[%s533] sm:$0x1]
        %v689 = vlaneseq
        %v690 = vshrl.u32 %v689, 7
        %v691 = vsub.s32 0, %v690
        %v692 = vrot.slane %v687, %v691
        %v698 = vunpack.c.l.b16 %v683
        %v699 = vunpack.c.l.b16 %v684
        %v700 = vunpack.c.l.b16 %v685
        %v701 = vunpack.c.l.b16 %v686
        %v702 = vpack.c.b16 %v699, %v698
        %v703 = vpack.c.b16 %v701, %v700
        %706 = vmatprep.subr.bf16.mxu0 0
        %707 = vmatpush1.bf16.msra.mxu0 %v702
        %708 = vmatprep.subr.bf16.mxu0 0
        %709 = vmatpush1.bf16.msra.mxu0 %v703
        %710 = vmatprep.subr.bf16.mxu0 0
        %711 = vmatpush1.bf16.msra.mxu0 0
        %712 = vmatprep.subr.bf16.mxu0 0
        %713 = vmatpush1.bf16.msra.mxu0 0
        %714 = vmatprep.subr.bf16.mxu0 0
        %715 = vmatpush1.bf16.msra.mxu0 0
        %716 = vmatprep.subr.bf16.mxu0 0
        %717 = vmatpush1.bf16.msra.mxu0 0
        %718 = vmatprep.subr.bf16.mxu0 0
        %719 = vmatpush1.bf16.msra.mxu0 0
        %720 = vmatprep.subr.bf16.mxu0 0
        %721 = vmatpush1.bf16.msra.mxu0 0
        %722 = vmatprep.subr.bf16.mxu0 0
        %723 = vmatpush1.bf16.msra.mxu0 0
        %724 = vmatprep.subr.bf16.mxu0 0
        %725 = vmatpush1.bf16.msra.mxu0 0
        %726 = vmatprep.subr.bf16.mxu0 0
        %727 = vmatpush1.bf16.msra.mxu0 0
        %728 = vmatprep.subr.bf16.mxu0 0
        %729 = vmatpush1.bf16.msra.mxu0 0
        %730 = vmatprep.subr.bf16.mxu0 0
        %731 = vmatpush1.bf16.msra.mxu0 0
        %732 = vmatprep.subr.bf16.mxu0 0
        %733 = vmatpush1.bf16.msra.mxu0 0
        %734 = vmatprep.subr.bf16.mxu0 0
        %735 = vmatpush1.bf16.msra.mxu0 0
        %736 = vmatprep.subr.bf16.mxu0 0
        %737 = vmatpush1.bf16.msra.mxu0 0
        %738 = vmatprep.mubr.bf16.mxu0 0
        %739 = vmatmul.mubr.bf16.gmra.mrb[0].mxu0 %v641
        %v740 = vpop.f32.mrb[0].mxu0
        %v741 = vadd.f32 %v692, %v740
        %v742 = vpop.f32.mrb[0].mxu0
        %v743 = vpop.f32.mrb[0].mxu0
        %v744 = vpop.f32.mrb[0].mxu0
        %745 = vdwg.mxu0
        %v746 = vld [vmem:[%s517] sm:$0xf]
        %v747 = vld [vmem:[%s517 + $0x4] sm:$0xf]
        %v748 = vld [vmem:[%s517 + $0x8] sm:$0xf]
        %v749 = vld [vmem:[%s517 + $0xc] sm:$0xf]
        %v750 = vld [vmem:[%s541] sm:$0x1]
        %v752 = vlaneseq
        %v753 = vshrl.u32 %v752, 7
        %v754 = vsub.s32 0, %v753
        %v755 = vrot.slane %v750, %v754
        %v761 = vunpack.c.l.b16 %v746
        %v762 = vunpack.c.l.b16 %v747
        %v763 = vunpack.c.l.b16 %v748
        %v764 = vunpack.c.l.b16 %v749
        %v765 = vpack.c.b16 %v762, %v761
        %v766 = vpack.c.b16 %v764, %v763
        %769 = vmatprep.subr.bf16.mxu0 0
        %770 = vmatpush1.bf16.msra.mxu0 %v765
        %771 = vmatprep.subr.bf16.mxu0 0
        %772 = vmatpush1.bf16.msra.mxu0 %v766
        %773 = vmatprep.subr.bf16.mxu0 0
        %774 = vmatpush1.bf16.msra.mxu0 0
        %775 = vmatprep.subr.bf16.mxu0 0
        %776 = vmatpush1.bf16.msra.mxu0 0
        %777 = vmatprep.subr.bf16.mxu0 0
        %778 = vmatpush1.bf16.msra.mxu0 0
        %779 = vmatprep.subr.bf16.mxu0 0
        %780 = vmatpush1.bf16.msra.mxu0 0
        %781 = vmatprep.subr.bf16.mxu0 0
        %782 = vmatpush1.bf16.msra.mxu0 0
        %783 = vmatprep.subr.bf16.mxu0 0
        %784 = vmatpush1.bf16.msra.mxu0 0
        %785 = vmatprep.subr.bf16.mxu0 0
        %786 = vmatpush1.bf16.msra.mxu0 0
        %787 = vmatprep.subr.bf16.mxu0 0
        %788 = vmatpush1.bf16.msra.mxu0 0
        %789 = vmatprep.subr.bf16.mxu0 0
        %790 = vmatpush1.bf16.msra.mxu0 0
        %791 = vmatprep.subr.bf16.mxu0 0
        %792 = vmatpush1.bf16.msra.mxu0 0
        %793 = vmatprep.subr.bf16.mxu0 0
        %794 = vmatpush1.bf16.msra.mxu0 0
        %795 = vmatprep.subr.bf16.mxu0 0
        %796 = vmatpush1.bf16.msra.mxu0 0
        %797 = vmatprep.subr.bf16.mxu0 0
        %798 = vmatpush1.bf16.msra.mxu0 0
        %799 = vmatprep.subr.bf16.mxu0 0
        %800 = vmatpush1.bf16.msra.mxu0 0
        %801 = vmatprep.mubr.bf16.mxu0 0
        %802 = vmatmul.mubr.bf16.gmra.mrb[0].mxu0 %v641
        %v803 = vpop.f32.mrb[0].mxu0
        %v804 = vadd.f32 %v755, %v803
        %v805 = vpop.f32.mrb[0].mxu0
        %v806 = vpop.f32.mrb[0].mxu0
        %v807 = vpop.f32.mrb[0].mxu0
        %808 = vdwg.mxu0
        %v809 = vpack.c.bf16 %v678, %v678
        %vm810 = vcmask 60416
        %811 = vst.msk [vmem:[%s598] sm:$0xf] %vm810, %v809
        %v812 = vpack.c.bf16 %v741, %v741
        %813 = vst.msk [vmem:[%s605] sm:$0xf] %vm810, %v812
        %v814 = vpack.c.bf16 %v804, %v804
        %815 = vst.msk [vmem:[%s612] sm:$0xf] %vm810, %v814
        %s816 = sand.u32 %s254, 1
        %s817 = scalar_lea.sflag [#allocation4], %s816
        %s818 = sand.u32 %s254, 1
        %s819 = smul.addr %s818, 4
        %s820 = scalar_lea.vmem [#allocation14], %s819
        %s821 = sand.u32 %s39, 1
        %s822 = scalar_lea.sflag [#allocation16], %s821
        %s823 = sand.u32 %s284, 1
        %s824 = smul.addr %s823, 4
        %s825 = scalar_lea.vmem [#allocation15], %s824
        %s826 = sand.u32 %s39, 1
        %s827 = scalar_lea.sflag [#allocation16], %s826
        %s828 = sand.u32 %s314, 1
        %s829 = smul.addr %s828, 4
        %s830 = scalar_lea.vmem [#allocation17], %s829
        // Predicated region
        $region77: #{tpu_custom_call.1} parent=47 // pred_check
          %p831 = pneg %p264
        $region78: #{tpu_custom_call.1} parent=47 // pred_check_branch
          %833 = sbr.rel (%p831) target = $region80
        $region79: #{tpu_custom_call.1} parent=47 // pred_region
          %s835 = ssub.s32 64, 64
          %836 = vsyncadd %s817, %s835
          %s837 = sadd.s32 %s45, %s46
          %s838 = smul.addr %s44, 4
          %s839 = sadd.s32 %s837, %s838
          %s840 = smul.addr %s839, 64
          %s841 = scalar_lea.hbm %s7, %s840
          %s843 = sshll.u32 %s820, 4
          %s844 = int_to_ptr.vmem [resolvable:$true] %s843
          %846 = dma.vmem_to_hbm [thread:$0]  %s844, 64, %s841, %s817
        $region80: #{tpu_custom_call.1} parent=47 // pred_fallthru
          _
        // Predicated region
        $region81: #{tpu_custom_call.1} parent=47 // pred_check
          %p847 = pneg %p294
        $region82: #{tpu_custom_call.1} parent=47 // pred_check_branch
          %849 = sbr.rel (%p847) target = $region84
        $region83: #{tpu_custom_call.1} parent=47 // pred_region
          %s851 = ssub.s32 64, 64
          %852 = vsyncadd %s822, %s851
          %s853 = sadd.s32 %s45, %s46
          %s854 = smul.addr %s44, 4
          %s855 = sadd.s32 %s853, %s854
          %s856 = smul.addr %s855, 64
          %s857 = scalar_lea.hbm %s8, %s856
          %s859 = sshll.u32 %s825, 4
          %s860 = int_to_ptr.vmem [resolvable:$true] %s859
          %862 = dma.vmem_to_hbm [thread:$0]  %s860, 64, %s857, %s822
        $region84: #{tpu_custom_call.1} parent=47 // pred_fallthru
          _
        // Predicated region
        $region85: #{tpu_custom_call.1} parent=47 // pred_check
          %p863 = pneg %p324
        $region86: #{tpu_custom_call.1} parent=47 // pred_check_branch
          %865 = sbr.rel (%p863) target = $region88
        $region87: #{tpu_custom_call.1} parent=47 // pred_region
          %s867 = ssub.s32 64, 64
          %868 = vsyncadd %s827, %s867
          %s869 = sadd.s32 %s45, %s46
          %s870 = smul.addr %s44, 4
          %s871 = sadd.s32 %s869, %s870
          %s872 = smul.addr %s871, 64
          %s873 = scalar_lea.hbm %s9, %s872
          %s875 = sshll.u32 %s830, 4
          %s876 = int_to_ptr.vmem [resolvable:$true] %s875
          %878 = dma.vmem_to_hbm [thread:$0]  %s876, 64, %s873, %s827
        $region88: #{tpu_custom_call.1} parent=47 // pred_fallthru
          _
      $region48: #{tpu_custom_call.1} parent=5 // pred_fallthru
        _
      %p879 = scmp.le.s32.totalorder 2, %s34
      // Predicated region
      $region89: #{tpu_custom_call.1} parent=5 // pred_check
        %p880 = pneg %p879
      $region90: #{tpu_custom_call.1} parent=5 // pred_check_branch
        %882 = sbr.rel (%p880) target = $region92
      $region91: #{tpu_custom_call.1} parent=5 // pred_region
        %s883 = ssub.s32 %s34, 2
        // Predicated region
        $region93: #{tpu_custom_call.1} parent=91 // pred_check
          %p884 = pneg %p270
        $region94: #{tpu_custom_call.1} parent=91 // pred_check_branch
          %886 = sbr.rel (%p884) target = $region96
        $region95: #{tpu_custom_call.1} parent=91 // pred_region
          %s887 = sand.u32 %s255, 1
          %s888 = scalar_lea.sflag [#allocation4], %s887
          %s889 = sand.u32 %s255, 1
          %s890 = smul.addr %s889, 4
          %s891 = scalar_lea.vmem [#allocation14], %s890
          %892 = dma.done %s888, 64
        $region96: #{tpu_custom_call.1} parent=91 // pred_fallthru
          _
        // Predicated region
        $region97: #{tpu_custom_call.1} parent=91 // pred_check
          %p893 = pneg %p300
        $region98: #{tpu_custom_call.1} parent=91 // pred_check_branch
          %895 = sbr.rel (%p893) target = $region100
        $region99: #{tpu_custom_call.1} parent=91 // pred_region
          %s896 = sand.u32 %s40, 1
          %s897 = scalar_lea.sflag [#allocation16], %s896
          %s898 = sand.u32 %s285, 1
          %s899 = smul.addr %s898, 4
          %s900 = scalar_lea.vmem [#allocation15], %s899
          %901 = dma.done %s897, 64
        $region100: #{tpu_custom_call.1} parent=91 // pred_fallthru
          _
        // Predicated region
        $region101: #{tpu_custom_call.1} parent=91 // pred_check
          %p902 = pneg %p330
        $region102: #{tpu_custom_call.1} parent=91 // pred_check_branch
          %904 = sbr.rel (%p902) target = $region104
        $region103: #{tpu_custom_call.1} parent=91 // pred_region
          %s905 = sand.u32 %s40, 1
          %s906 = scalar_lea.sflag [#allocation16], %s905
          %s907 = sand.u32 %s315, 1
          %s908 = smul.addr %s907, 4
          %s909 = scalar_lea.vmem [#allocation17], %s908
          %910 = dma.done %s906, 64
        $region104: #{tpu_custom_call.1} parent=91 // pred_fallthru
          _
      $region92: #{tpu_custom_call.1} parent=5 // pred_fallthru
        _
    $region6: #{tpu_custom_call.1} parent=1 // loop_footer
      %s38 = sadd.s32 1, %s34
    $region7: #{tpu_custom_call.1} parent=1 // loop_footer_branch
      %33 = sbr.rel target = $region3
    $region8: #{tpu_custom_call.1} parent=1 // loop_exit
      _
    %911 = vsyncpa [#allocation3], 1
    %s912 = scalar_lea.sflag [#allocation3], 1
    %913 = vsyncpa %s912, 1
    %914 = vsyncpa [#allocation6], 1
    %s915 = scalar_lea.sflag [#allocation6], 1
    %916 = vsyncpa %s915, 1
    %917 = vsyncpa [#allocation9], 1
    %s918 = scalar_lea.sflag [#allocation9], 1
    %919 = vsyncpa %s918, 1
    %920 = vsyncpa [#allocation12], 1
    %s921 = scalar_lea.sflag [#allocation12], 1
    %922 = vsyncpa %s921, 1
    %923 = vsyncpa [#allocation4], 1
    %s924 = scalar_lea.sflag [#allocation4], 1
    %925 = vsyncpa %s924, 1
    %926 = vsyncpa [#allocation16], 1
    %s927 = scalar_lea.sflag [#allocation16], 1
    %928 = vsyncpa %s927, 1

</llo_original>
